<compile_context>
chip_gen: v7x
topology: tpu7x:2x2x1
jax: 0.10.0
libtpu: 0.0.40
codegen_flags: <defaults>
</compile_context>

<pallas_src>
import functools

import jax
import jax.numpy as jnp
from jax.experimental import pallas as pl
from jax.experimental.pallas import tpu as pltpu


# ----------------------------- hyper-parameters ------------------------------
class param:
    bs = 2        # batch size
    x_dim = 16    # controller input size
    hid = 32      # LSTM hidden size
    v_t = 32      # module output size
    W = 8         # memory word width
    R = 2         # number of read heads
    N = 16        # number of memory slots


_EPS = 1e-6


def b_xi_size():
    # read keys + read strengths + write key + write strength + erase + write vec
    return param.R * param.W + param.R + param.W + 1 + param.W + param.W


# ------------------- weight-slab row layout (host-side packing) -------------------
_XH_ROWS = param.x_dim + param.hid               # 48  : [wx ; wh]       (gates matmul)
_OI_ROW0 = _XH_ROWS                              # 48  : [wout | wxi]    (output+interface)
_OI_ROW1 = _OI_ROW0 + param.hid                  # 80
_WR_ROW0 = _OI_ROW1                              # 80  : W_r             (read projection)
_WR_ROW1 = _WR_ROW0 + param.R * param.W          # 96
_B_ROW = _WR_ROW1                                # 96  : LSTM bias (4H = 128 lanes)
_BOI_ROW = 104                                   # 104 : [bout | bxi] bias (sublane aligned)
_SLAB_ROWS = 112
_SLAB_LANES = 128


def pack_weight_slab(wx, wh, b, wout, bout, wxi, bxi, W_r):
    """Coalesce all weights/biases into one lane-padded [112,128] f32 slab."""
    X, H, VT = param.x_dim, param.hid, param.v_t
    XI = b_xi_size()
    slab = jnp.zeros((_SLAB_ROWS, _SLAB_LANES), jnp.float32)
    slab = slab.at[0:X, :].set(wx)                                # [16,128]
    slab = slab.at[X:X + H, :].set(wh)                            # [32,128]
    slab = slab.at[_OI_ROW0:_OI_ROW1, 0:VT].set(wout)             # [32, 32]
    slab = slab.at[_OI_ROW0:_OI_ROW1, VT:VT + XI].set(wxi)        # [32, 43]
    slab = slab.at[_WR_ROW0:_WR_ROW1, 0:VT].set(W_r)              # [16, 32]
    slab = slab.at[_B_ROW, :].set(b.reshape(-1))                  # [128]
    slab = slab.at[_BOI_ROW, 0:VT].set(bout.reshape(-1))          # [32]
    slab = slab.at[_BOI_ROW, VT:VT + XI].set(bxi.reshape(-1))     # [43]
    return slab


# ------------------------------ fused sequence kernel -----------------------------
def _seq_kernel(x_ref, w_ref, hc0_ref, M0_ref, y_ref, hc_ref, M_ref):
    B, H, N, W, R, VT = param.bs, param.hid, param.N, param.W, param.R, param.v_t
    t = pl.program_id(0)

    # Output refs have constant block indices -> they stay resident in VMEM across the
    # whole time grid and double as the recurrent-state accumulators.
    @pl.when(t == 0)
    def _():
        hc_ref[...] = hc0_ref[...]
        M_ref[...] = M0_ref[...]

    x = x_ref[0, :, :]                     # [B, X]
    hc = hc_ref[...]                       # [B, 2H]  (packed h | c)
    h = hc[:, 0:H]
    c = hc[:, H:2 * H]
    M = M_ref[...]                         # [B, N, W]

    def softmax_last(z):
        # max-subtract / exp / lane-sum / EUP approximate reciprocal
        z = z - jnp.max(z, axis=-1, keepdims=True)
        ez = jnp.exp(z)
        return ez * pl.reciprocal(jnp.sum(ez, axis=-1, keepdims=True), approx=True)

    # ----------------- controller: LSTM cell step (one fused MXU pass) -----------------
    xh = jnp.concatenate([x, h], axis=-1)                           # [B, X+H] = [B, 48]
    gates = (jnp.dot(xh, w_ref[0:_XH_ROWS, :],
                     preferred_element_type=jnp.float32)
             + w_ref[_B_ROW:_B_ROW + 1, :])                         # [B, 4H] = [B, 128]
    sg = jax.nn.sigmoid(gates)          # full-vreg EUP pass, slice afterwards
    tg = jnp.tanh(gates)                # full-vreg EUP pass
    i_g = sg[:, 0 * H:1 * H]
    f_g = sg[:, 1 * H:2 * H]
    g_g = tg[:, 2 * H:3 * H]
    o_g = sg[:, 3 * H:4 * H]

    c_new = f_g * c + i_g * g_g
    h_new = o_g * jnp.tanh(c_new)

    # ----------------- output + interface heads (one fused MXU pass) -----------------
    oi = (jnp.dot(h_new, w_ref[_OI_ROW0:_OI_ROW1, :],
                  preferred_element_type=jnp.float32)
          + w_ref[_BOI_ROW:_BOI_ROW + 1, :])                        # [B, 128] (75 valid)
    output = oi[:, 0:VT]

    base = VT
    kr_flat = oi[:, base:base + R * W]                              # [B, R*W]
    o1 = base + R * W
    br = 1.0 + jax.nn.softplus(oi[:, o1:o1 + R])                    # [B, R]
    o2 = o1 + R
    kw = oi[:, o2:o2 + W]                                           # [B, W]
    o3 = o2 + W
    bw = 1.0 + jax.nn.softplus(oi[:, o3:o3 + 1])                    # [B, 1]
    o4 = o3 + 1
    e = jax.nn.sigmoid(oi[:, o4:o4 + W])                            # [B, W]
    o5 = o4 + W
    v = oi[:, o5:o5 + W]                                            # [B, W]

    # ----------------- memory: content-based write (VPU + XLU) -----------------
    M_n = M * jax.lax.rsqrt(jnp.sum(M * M, axis=-1, keepdims=True) + _EPS)
    kw_n = kw * jax.lax.rsqrt(jnp.sum(kw * kw, axis=-1, keepdims=True) + _EPS)
    sim_w = jnp.sum(M_n * kw_n[:, None, :], axis=-1)                # [B, N]
    ww = softmax_last(bw * sim_w)                                   # [B, N]
    M_new = (M * (1.0 - ww[:, :, None] * e[:, None, :])
             + ww[:, :, None] * v[:, None, :])                      # [B, N, W]

    # --------- memory: content reads (both heads) + fused read projection ---------
    Mp_n = M_new * jax.lax.rsqrt(jnp.sum(M_new * M_new, axis=-1, keepdims=True) + _EPS)
    rvs = []
    for r in range(R):   # static unroll, R == 2
        kr_r = kr_flat[:, r * W:(r + 1) * W]
        kr_n = kr_r * jax.lax.rsqrt(jnp.sum(kr_r * kr_r, axis=-1, keepdims=True) + _EPS)
        sim_r = jnp.sum(kr_n[:, None, :] * Mp_n, axis=-1)           # [B, N] (lane reduce)
        w_att = softmax_last(br[:, r:r + 1] * sim_r)                # [B, N]
        rvs.append(jnp.sum(w_att[:, :, None] * M_new, axis=1))      # [B, W] (sublane reduce)
    rv = jnp.concatenate(rvs, axis=-1)                              # [B, R*W] = [B, 16]
    proj = jnp.dot(rv, w_ref[_WR_ROW0:_WR_ROW1, :],
                   preferred_element_type=jnp.float32)              # [B, 128] (32 valid)
    y = output + proj[:, 0:VT]

    # ----------------- lane-dense, single stores -----------------
    y_ref[0, :, :] = y
    hc_ref[...] = jnp.concatenate([h_new, c_new], axis=-1)
    M_ref[...] = M_new


# ------------------------------ kernel wrapper --------------------------------
def dnc_sequence(x_seq, hc0, M0, w_slab):
    T = x_seq.shape[0]
    B, X, H, N, W, R, VT = (param.bs, param.x_dim, param.hid, param.N,
                            param.W, param.R, param.v_t)

    out_shapes = (
        jax.ShapeDtypeStruct((T, B, VT), jnp.float32),     # y per step
        jax.ShapeDtypeStruct((B, 2 * H), jnp.float32),     # final hc (packed h | c)
        jax.ShapeDtypeStruct((B, N, W), jnp.float32),      # final M
    )

    flops_step = (2 * B * (X + H) * 4 * H          # fused gate matmul
                  + 2 * B * H * 128                # fused output+interface matmul
                  + 2 * B * N * W * (R + 3)        # memory write/read similarity & update
                  + 2 * B * R * W * 128)           # fused read projection
    transc_step = B * (8 * H + N * (R + 3) + 2 * W + R + 3)
    bytes_accessed = 4 * (x_seq.size + w_slab.size + hc0.size + M0.size
                          + T * B * VT + B * 2 * H + B * N * W)

    grid_spec = pltpu.PrefetchScalarGridSpec(
        num_scalar_prefetch=0,
        grid=(T,),
        in_specs=[
            pl.BlockSpec((1, B, X), lambda t: (t, 0, 0)),                     # x_t per step
            pl.BlockSpec((_SLAB_ROWS, _SLAB_LANES), lambda t: (0, 0)),        # weights resident
            pl.BlockSpec((B, 2 * H), lambda t: (0, 0)),                       # hc0 resident
            pl.BlockSpec((B, N, W), lambda t: (0, 0, 0)),                     # M0 resident
        ],
        out_specs=(
            pl.BlockSpec((1, B, VT), lambda t: (t, 0, 0)),                    # y_t per step
            pl.BlockSpec((B, 2 * H), lambda t: (0, 0)),                       # hc accumulator
            pl.BlockSpec((B, N, W), lambda t: (0, 0, 0)),                     # M accumulator
        ),
    )

    return pl.pallas_call(
        _seq_kernel,
        out_shape=out_shapes,
        grid_spec=grid_spec,
        # overwrite the recurrent state in place: hc0 -> hc_out, M0 -> M_out
        input_output_aliases={2: 1, 3: 2},
        compiler_params=pltpu.CompilerParams(dimension_semantics=("arbitrary",)),
        cost_estimate=pl.CostEstimate(flops=T * flops_step,
                                      transcendentals=T * transc_step,
                                      bytes_accessed=bytes_accessed),
    )(x_seq, w_slab, hc0, M0)


# state (hc, M) is donated so the in-place alias avoids any HBM copy per call.
@functools.partial(jax.jit, donate_argnums=(1, 2))
def issharinginputtheproblem_forward(x_seq, hc, M, w_slab):
    return dnc_sequence(x_seq, hc, M, w_slab)


# --------------------------- pure-JAX reference --------------------------------
def reference_step(x, hc, M, params):
    wx, wh, b, wout, bout, wxi, bxi, W_r = params
    B, H, N, W, R = param.bs, param.hid, param.N, param.W, param.R

    h, c = hc[:, :H], hc[:, H:]
    gates = x @ wx + h @ wh + b
    i_g = jax.nn.sigmoid(gates[:, 0 * H:1 * H])
    f_g = jax.nn.sigmoid(gates[:, 1 * H:2 * H])
    g_g = jnp.tanh(gates[:, 2 * H:3 * H])
    o_g = jax.nn.sigmoid(gates[:, 3 * H:4 * H])
    c_new = f_g * c + i_g * g_g
    h_new = o_g * jnp.tanh(c_new)
    output = h_new @ wout + bout
    xi = h_new @ wxi + bxi

    o = 0
    kr = xi[:, o:o + R * W].reshape(B, R, W);          o += R * W
    br = 1.0 + jax.nn.softplus(xi[:, o:o + R]);        o += R
    kw = xi[:, o:o + W];                               o += W
    bw = 1.0 + jax.nn.softplus(xi[:, o:o + 1]);        o += 1
    e = jax.nn.sigmoid(xi[:, o:o + W]);                o += W
    v = xi[:, o:o + W]

    M_n = M * jax.lax.rsqrt(jnp.sum(M * M, axis=-1, keepdims=True) + _EPS)
    kw_n = kw * jax.lax.rsqrt(jnp.sum(kw * kw, axis=-1, keepdims=True) + _EPS)
    sim_w = jnp.einsum('bnw,bw->bn', M_n, kw_n)
    ww = jax.nn.softmax(bw * sim_w, axis=-1)
    M_new = M * (1.0 - ww[:, :, None] * e[:, None, :]) + ww[:, :, None] * v[:, None, :]

    Mp_n = M_new * jax.lax.rsqrt(jnp.sum(M_new * M_new, axis=-1, keepdims=True) + _EPS)
    kr_n = kr * jax.lax.rsqrt(jnp.sum(kr * kr, axis=-1, keepdims=True) + _EPS)
    sim_r = jnp.einsum('brw,bnw->brn', kr_n, Mp_n)
    wr_att = jax.nn.softmax(br[:, :, None] * sim_r, axis=-1)
    read_vec = jnp.einsum('brn,bnw->brw', wr_att, M_new)

    y = output + read_vec.reshape(B, R * W) @ W_r
    hc_new = jnp.concatenate([h_new, c_new], axis=-1)
    return y, hc_new, M_new


def reference_sequence(x_seq, hc, M, params):
    ys = []
    for t in range(x_seq.shape[0]):
        y, hc, M = reference_step(x_seq[t], hc, M, params)
        ys.append(y)
    return jnp.stack(ys, axis=0), hc, M


# ---------------------------------- main --------------------------------------
if __name__ == "__main__":
    key = jax.random.PRNGKey(0)
    ks = jax.random.split(key, 10)

    B, X, H, VT, W, R, N = (param.bs, param.x_dim, param.hid, param.v_t,
                            param.W, param.R, param.N)
    XI = b_xi_size()
    T = 8   # sequence length processed inside one pallas_call

    scale = 0.1
    wx = scale * jax.random.normal(ks[0], (X, 4 * H), jnp.float32)
    wh = scale * jax.random.normal(ks[1], (H, 4 * H), jnp.float32)
    b = jnp.zeros((1, 4 * H), jnp.float32)
    wout = scale * jax.random.normal(ks[2], (H, VT), jnp.float32)
    bout = jnp.zeros((1, VT), jnp.float32)
    wxi = scale * jax.random.normal(ks[3], (H, XI), jnp.float32)
    bxi = jnp.zeros((1, XI), jnp.float32)
    # The PyTorch module zero-initializes W_r; use a nonzero value here so the
    # read -> projection path is actually exercised by the numerical check.
    W_r = scale * jax.random.normal(ks[6], (W * R, VT), jnp.float32)

    params = (wx, wh, b, wout, bout, wxi, bxi, W_r)
    w_slab = pack_weight_slab(*params)

    # initial state: zero LSTM state (packed h|c), small deterministic memory
    hc0 = jnp.zeros((B, 2 * H), jnp.float32)
    M0 = 1e-3 * jax.random.normal(ks[4], (B, N, W), jnp.float32)
    x_seq = jax.random.normal(ks[5], (T, B, X), jnp.float32)

    # pure-JAX reference first (hc0/M0 are donated to the kernel call below)
    y_ref, hc_ref, M_ref = reference_sequence(x_seq, hc0, M0, params)
    jax.block_until_ready((y_ref, hc_ref, M_ref))

    y, hc_new, M_new = issharinginputtheproblem_forward(x_seq, hc0, M0, w_slab)
    y = jax.block_until_ready(y)
    jax.block_until_ready((hc_new, M_new))

    assert y.shape == (T, B, VT) and y.dtype == jnp.float32
    # LSTM/controller path is exact (no approximate ops) -> tight tolerance.
    assert bool(jnp.allclose(hc_new, hc_ref, atol=1e-3, rtol=1e-3))
    # y / M go through the EUP approximate-reciprocal softmax (intentional perf trade),
    # accumulated over T steps -> slightly looser tolerance.
    assert bool(jnp.allclose(y, y_ref, atol=1e-2, rtol=1e-2))
    assert bool(jnp.allclose(M_new, M_ref, atol=1e-2, rtol=1e-2))
    print("KERNEL_OK")
</pallas_src>

<mosaic_0001>
module attributes {stable_mosaic.version = 11 : i64} {
  func.func @_seq_kernel(%arg0: i32, %arg1: memref<1x2x16xf32, #tpu.memory_space<vmem>>, %arg2: memref<112x128xf32, #tpu.memory_space<vmem>>, %arg3: memref<2x64xf32, #tpu.memory_space<vmem>>, %arg4: memref<2x16x8xf32, #tpu.memory_space<vmem>>, %arg5: memref<1x2x32xf32, #tpu.memory_space<vmem>>, %arg6: memref<2x64xf32, #tpu.memory_space<vmem>>, %arg7: memref<2x16x8xf32, #tpu.memory_space<vmem>>) attributes {dimension_semantics = [#tpu.dimension_semantics<arbitrary>], iteration_bounds = array<i64: 8>, scalar_prefetch = 0 : i64, scratch_operands = 0 : i64, tpu.core_type = #tpu.core_type<tc>, window_params = [{transform_indices = @transform_0, window_bounds = array<i64: 1, 2, 16>}, {pipeline_mode = #tpu.pipeline_mode<synchronous>, transform_indices = @transform_1, window_bounds = array<i64: 112, 128>}, {pipeline_mode = #tpu.pipeline_mode<synchronous>, transform_indices = @transform_2, window_bounds = array<i64: 2, 64>}, {pipeline_mode = #tpu.pipeline_mode<synchronous>, transform_indices = @transform_3, window_bounds = array<i64: 2, 16, 8>}, {transform_indices = @transform_4, window_bounds = array<i64: 1, 2, 32>}, {pipeline_mode = #tpu.pipeline_mode<synchronous>, transform_indices = @transform_5, window_bounds = array<i64: 2, 64>}, {pipeline_mode = #tpu.pipeline_mode<synchronous>, transform_indices = @transform_6, window_bounds = array<i64: 2, 16, 8>}]} {
    %c0_i32 = arith.constant 0 : i32
    %0 = arith.cmpi eq, %arg0, %c0_i32 : i32
    %1 = arith.extui %0 : i1 to i32
    %c0_i32_0 = arith.constant 0 : i32
    %2 = arith.cmpi ne, %1, %c0_i32_0 : i32
    scf.if %2 {
      %c0_54 = arith.constant 0 : index
      %c0_55 = arith.constant 0 : index
      %204 = vector.load %arg3[%c0_54, %c0_55] : memref<2x64xf32, #tpu.memory_space<vmem>>, vector<2x64xf32>
      %c0_56 = arith.constant 0 : index
      %c0_57 = arith.constant 0 : index
      %205 = vector.load %arg6[%c0_56, %c0_57] : memref<2x64xf32, #tpu.memory_space<vmem>>, vector<2x64xf32>
      tpu.vector_store %arg6[%c0_56, %c0_57], %204 {strides = array<i32>} : memref<2x64xf32, #tpu.memory_space<vmem>>, vector<2x64xf32>,
      %c0_58 = arith.constant 0 : index
      %c0_59 = arith.constant 0 : index
      %c0_60 = arith.constant 0 : index
      %206 = vector.load %arg4[%c0_58, %c0_59, %c0_60] : memref<2x16x8xf32, #tpu.memory_space<vmem>>, vector<2x16x8xf32>
      %c0_61 = arith.constant 0 : index
      %c0_62 = arith.constant 0 : index
      %c0_63 = arith.constant 0 : index
      %207 = vector.load %arg7[%c0_61, %c0_62, %c0_63] : memref<2x16x8xf32, #tpu.memory_space<vmem>>, vector<2x16x8xf32>
      tpu.vector_store %arg7[%c0_61, %c0_62, %c0_63], %206 {strides = array<i32>} : memref<2x16x8xf32, #tpu.memory_space<vmem>>, vector<2x16x8xf32>,
    } else {
    }
    %c0 = arith.constant 0 : index
    %c0_1 = arith.constant 0 : index
    %c0_2 = arith.constant 0 : index
    %3 = vector.load %arg1[%c0, %c0_1, %c0_2] : memref<1x2x16xf32, #tpu.memory_space<vmem>>, vector<1x2x16xf32>
    %4 = vector.shape_cast %3 : vector<1x2x16xf32> to vector<2x16xf32>
    %c0_3 = arith.constant 0 : index
    %c0_4 = arith.constant 0 : index
    %5 = vector.load %arg6[%c0_3, %c0_4] : memref<2x64xf32, #tpu.memory_space<vmem>>, vector<2x64xf32>
    %6 = vector.extract_strided_slice %5 {offsets = [0, 0], sizes = [2, 32], strides = [1, 1]} : vector<2x64xf32> to vector<2x32xf32>
    %7 = vector.extract_strided_slice %5 {offsets = [0, 32], sizes = [2, 32], strides = [1, 1]} : vector<2x64xf32> to vector<2x32xf32>
    %c0_5 = arith.constant 0 : index
    %c0_6 = arith.constant 0 : index
    %c0_7 = arith.constant 0 : index
    %8 = vector.load %arg7[%c0_5, %c0_6, %c0_7] : memref<2x16x8xf32, #tpu.memory_space<vmem>>, vector<2x16x8xf32>
    %9 = tpu.concatenate %4, %6 in 1 : vector<2x16xf32>, vector<2x32xf32> -> vector<2x48xf32>
    %c0_8 = arith.constant 0 : index
    %c0_9 = arith.constant 0 : index
    %10 = vector.load %arg2[%c0_8, %c0_9] : memref<112x128xf32, #tpu.memory_space<vmem>>, vector<48x128xf32>
    %cst = arith.constant dense<0.000000e+00> : vector<2x128xf32>
    %11 = tpu.matmul %9, %10, %cst {dimension_numbers = #tpu.dot_dimension_numbers<[1], [0], [0], [1], [0, 0, 1, 1], [], []>} : vector<2x48xf32>, vector<48x128xf32>, vector<2x128xf32> -> vector<2x128xf32>
    %c96 = arith.constant 96 : index
    %c0_10 = arith.constant 0 : index
    %12 = vector.load %arg2[%c96, %c0_10] : memref<112x128xf32, #tpu.memory_space<vmem>>, vector<1x128xf32>
    %13 = vector.broadcast %12 : vector<1x128xf32> to vector<2x128xf32>
    %14 = arith.addf %11, %13 : vector<2x128xf32>
    %15 = arith.negf %14 : vector<2x128xf32>
    %16 = math.exp %15 : vector<2x128xf32>
    %cst_11 = arith.constant 1.000000e+00 : f32
    %17 = vector.broadcast %cst_11 : f32 to vector<2x128xf32>
    %18 = arith.addf %17, %16 : vector<2x128xf32>
    %19 = arith.divf %17, %18 : vector<2x128xf32>
    %20 = math.tanh %14 : vector<2x128xf32>
    %21 = vector.extract_strided_slice %19 {offsets = [0, 0], sizes = [2, 32], strides = [1, 1]} : vector<2x128xf32> to vector<2x32xf32>
    %22 = vector.extract_strided_slice %19 {offsets = [0, 32], sizes = [2, 32], strides = [1, 1]} : vector<2x128xf32> to vector<2x32xf32>
    %23 = vector.extract_strided_slice %20 {offsets = [0, 64], sizes = [2, 32], strides = [1, 1]} : vector<2x128xf32> to vector<2x32xf32>
    %24 = vector.extract_strided_slice %19 {offsets = [0, 96], sizes = [2, 32], strides = [1, 1]} : vector<2x128xf32> to vector<2x32xf32>
    %25 = arith.mulf %22, %7 : vector<2x32xf32>
    %26 = arith.mulf %21, %23 : vector<2x32xf32>
    %27 = arith.addf %25, %26 : vector<2x32xf32>
    %28 = math.tanh %27 : vector<2x32xf32>
    %29 = arith.mulf %24, %28 : vector<2x32xf32>
    %c48 = arith.constant 48 : index
    %c0_12 = arith.constant 0 : index
    %30 = vector.load %arg2[%c48, %c0_12] : memref<112x128xf32, #tpu.memory_space<vmem>>, vector<32x128xf32>
    %cst_13 = arith.constant dense<0.000000e+00> : vector<2x128xf32>
    %31 = tpu.matmul %29, %30, %cst_13 {dimension_numbers = #tpu.dot_dimension_numbers<[1], [0], [0], [1], [0, 0, 1, 1], [], []>} : vector<2x32xf32>, vector<32x128xf32>, vector<2x128xf32> -> vector<2x128xf32>
    %c104 = arith.constant 104 : index
    %c0_14 = arith.constant 0 : index
    %32 = vector.load %arg2[%c104, %c0_14] : memref<112x128xf32, #tpu.memory_space<vmem>>, vector<1x128xf32>
    %33 = vector.broadcast %32 : vector<1x128xf32> to vector<2x128xf32>
    %34 = arith.addf %31, %33 : vector<2x128xf32>
    %35 = vector.extract_strided_slice %34 {offsets = [0, 0], sizes = [2, 32], strides = [1, 1]} : vector<2x128xf32> to vector<2x32xf32>
    %36 = vector.extract_strided_slice %34 {offsets = [0, 32], sizes = [2, 16], strides = [1, 1]} : vector<2x128xf32> to vector<2x16xf32>
    %37 = vector.extract_strided_slice %34 {offsets = [0, 48], sizes = [2, 2], strides = [1, 1]} : vector<2x128xf32> to vector<2x2xf32>
    %cst_15 = arith.constant 0.000000e+00 : f32
    %38 = vector.broadcast %cst_15 : f32 to vector<2x2xf32>
    %39 = arith.maximumf %37, %38 : vector<2x2xf32>
    %40 = vector.broadcast %cst_15 : f32 to vector<2x2xf32>
    %41 = arith.subf %37, %40 : vector<2x2xf32>
    %42 = arith.cmpf one, %41, %41 : vector<2x2xf32>
    %43 = vector.broadcast %cst_15 : f32 to vector<2x2xf32>
    %44 = arith.addf %37, %43 : vector<2x2xf32>
    %45 = math.absf %41 : vector<2x2xf32>
    %cst_16 = arith.constant 0.000000e+00 : f32
    %46 = vector.broadcast %cst_16 : f32 to vector<2x2xf32>
    %47 = arith.subf %46, %45 : vector<2x2xf32>
    %48 = math.exp %47 : vector<2x2xf32>
    %49 = math.log1p %48 : vector<2x2xf32>
    %50 = arith.addf %39, %49 : vector<2x2xf32>
    %51 = arith.select %42, %44, %50 : vector<2x2xi1>, vector<2x2xf32>
    %cst_17 = arith.constant 1.000000e+00 : f32
    %52 = vector.broadcast %cst_17 : f32 to vector<2x2xf32>
    %53 = arith.addf %52, %51 : vector<2x2xf32>
    %54 = vector.extract_strided_slice %34 {offsets = [0, 50], sizes = [2, 8], strides = [1, 1]} : vector<2x128xf32> to vector<2x8xf32>
    %55 = vector.extract_strided_slice %34 {offsets = [0, 58], sizes = [2, 1], strides = [1, 1]} : vector<2x128xf32> to vector<2x1xf32>
    %cst_18 = arith.constant 0.000000e+00 : f32
    %56 = vector.broadcast %cst_18 : f32 to vector<2x1xf32>
    %57 = arith.maximumf %55, %56 : vector<2x1xf32>
    %58 = vector.broadcast %cst_18 : f32 to vector<2x1xf32>
    %59 = arith.subf %55, %58 : vector<2x1xf32>
    %60 = arith.cmpf one, %59, %59 : vector<2x1xf32>
    %61 = vector.broadcast %cst_18 : f32 to vector<2x1xf32>
    %62 = arith.addf %55, %61 : vector<2x1xf32>
    %63 = math.absf %59 : vector<2x1xf32>
    %cst_19 = arith.constant 0.000000e+00 : f32
    %64 = vector.broadcast %cst_19 : f32 to vector<2x1xf32>
    %65 = arith.subf %64, %63 : vector<2x1xf32>
    %66 = math.exp %65 : vector<2x1xf32>
    %67 = math.log1p %66 : vector<2x1xf32>
    %68 = arith.addf %57, %67 : vector<2x1xf32>
    %69 = arith.select %60, %62, %68 : vector<2x1xi1>, vector<2x1xf32>
    %cst_20 = arith.constant 1.000000e+00 : f32
    %70 = vector.broadcast %cst_20 : f32 to vector<2x1xf32>
    %71 = arith.addf %70, %69 : vector<2x1xf32>
    %72 = vector.extract_strided_slice %34 {offsets = [0, 59], sizes = [2, 8], strides = [1, 1]} : vector<2x128xf32> to vector<2x8xf32>
    %73 = arith.negf %72 : vector<2x8xf32>
    %74 = math.exp %73 : vector<2x8xf32>
    %cst_21 = arith.constant 1.000000e+00 : f32
    %75 = vector.broadcast %cst_21 : f32 to vector<2x8xf32>
    %76 = arith.addf %75, %74 : vector<2x8xf32>
    %77 = arith.divf %75, %76 : vector<2x8xf32>
    %78 = vector.extract_strided_slice %34 {offsets = [0, 67], sizes = [2, 8], strides = [1, 1]} : vector<2x128xf32> to vector<2x8xf32>
    %79 = arith.mulf %8, %8 : vector<2x16x8xf32>
    %cst_22 = arith.constant dense<0.000000e+00> : vector<2x16xf32>
    %80 = vector.multi_reduction <add>, %79, %cst_22 [2] : vector<2x16x8xf32> to vector<2x16xf32>
    %81 = vector.shape_cast %80 : vector<2x16xf32> to vector<2x16x1xf32>
    %cst_23 = arith.constant 9.99999997E-7 : f32
    %82 = vector.broadcast %cst_23 : f32 to vector<2x16x1xf32>
    %83 = arith.addf %81, %82 : vector<2x16x1xf32>
    %84 = math.rsqrt %83 : vector<2x16x1xf32>
    %85 = vector.broadcast %84 : vector<2x16x1xf32> to vector<2x16x8xf32>
    %86 = arith.mulf %8, %85 : vector<2x16x8xf32>
    %87 = arith.mulf %54, %54 : vector<2x8xf32>
    %cst_24 = arith.constant dense<0.000000e+00> : vector<2xf32>
    %88 = vector.multi_reduction <add>, %87, %cst_24 [1] : vector<2x8xf32> to vector<2xf32>
    %89 = vector.shape_cast %88 : vector<2xf32> to vector<2x1xf32>
    %cst_25 = arith.constant 9.99999997E-7 : f32
    %90 = vector.broadcast %cst_25 : f32 to vector<2x1xf32>
    %91 = arith.addf %89, %90 : vector<2x1xf32>
    %92 = math.rsqrt %91 : vector<2x1xf32>
    %93 = vector.broadcast %92 : vector<2x1xf32> to vector<2x8xf32>
    %94 = arith.mulf %54, %93 : vector<2x8xf32>
    %95 = vector.shape_cast %94 : vector<2x8xf32> to vector<2x1x8xf32>
    %96 = vector.broadcast %95 : vector<2x1x8xf32> to vector<2x16x8xf32>
    %97 = arith.mulf %86, %96 : vector<2x16x8xf32>
    %cst_26 = arith.constant dense<0.000000e+00> : vector<2x16xf32>
    %98 = vector.multi_reduction <add>, %97, %cst_26 [2] : vector<2x16x8xf32> to vector<2x16xf32>
    %99 = vector.broadcast %71 : vector<2x1xf32> to vector<2x16xf32>
    %100 = arith.mulf %99, %98 : vector<2x16xf32>
    %cst_27 = arith.constant dense<0xFF800000> : vector<2xf32>
    %101 = vector.multi_reduction <maximumf>, %100, %cst_27 [1] : vector<2x16xf32> to vector<2xf32>
    %102 = vector.shape_cast %101 : vector<2xf32> to vector<2x1xf32>
    %103 = vector.broadcast %102 : vector<2x1xf32> to vector<2x16xf32>
    %104 = arith.subf %100, %103 : vector<2x16xf32>
    %105 = math.exp %104 : vector<2x16xf32>
    %cst_28 = arith.constant dense<0.000000e+00> : vector<2xf32>
    %106 = vector.multi_reduction <add>, %105, %cst_28 [1] : vector<2x16xf32> to vector<2xf32>
    %107 = vector.shape_cast %106 : vector<2xf32> to vector<2x1xf32>
    %108 = tpu.reciprocal %107 {approx = true} : vector<2x1xf32> -> vector<2x1xf32>
    %109 = vector.broadcast %108 : vector<2x1xf32> to vector<2x16xf32>
    %110 = arith.mulf %105, %109 : vector<2x16xf32>
    %111 = vector.shape_cast %110 : vector<2x16xf32> to vector<2x16x1xf32>
    %112 = vector.shape_cast %77 : vector<2x8xf32> to vector<2x1x8xf32>
    %113 = vector.broadcast %111 : vector<2x16x1xf32> to vector<2x16x8xf32>
    %114 = vector.broadcast %112 : vector<2x1x8xf32> to vector<2x16x8xf32>
    %115 = arith.mulf %113, %114 : vector<2x16x8xf32>
    %cst_29 = arith.constant 1.000000e+00 : f32
    %116 = vector.broadcast %cst_29 : f32 to vector<2x16x8xf32>
    %117 = arith.subf %116, %115 : vector<2x16x8xf32>
    %118 = arith.mulf %8, %117 : vector<2x16x8xf32>
    %119 = vector.shape_cast %110 : vector<2x16xf32> to vector<2x16x1xf32>
    %120 = vector.shape_cast %78 : vector<2x8xf32> to vector<2x1x8xf32>
    %121 = vector.broadcast %119 : vector<2x16x1xf32> to vector<2x16x8xf32>
    %122 = vector.broadcast %120 : vector<2x1x8xf32> to vector<2x16x8xf32>
    %123 = arith.mulf %121, %122 : vector<2x16x8xf32>
    %124 = arith.addf %118, %123 : vector<2x16x8xf32>
    %125 = arith.mulf %124, %124 : vector<2x16x8xf32>
    %cst_30 = arith.constant dense<0.000000e+00> : vector<2x16xf32>
    %126 = vector.multi_reduction <add>, %125, %cst_30 [2] : vector<2x16x8xf32> to vector<2x16xf32>
    %127 = vector.shape_cast %126 : vector<2x16xf32> to vector<2x16x1xf32>
    %cst_31 = arith.constant 9.99999997E-7 : f32
    %128 = vector.broadcast %cst_31 : f32 to vector<2x16x1xf32>
    %129 = arith.addf %127, %128 : vector<2x16x1xf32>
    %130 = math.rsqrt %129 : vector<2x16x1xf32>
    %131 = vector.broadcast %130 : vector<2x16x1xf32> to vector<2x16x8xf32>
    %132 = arith.mulf %124, %131 : vector<2x16x8xf32>
    %133 = vector.extract_strided_slice %36 {offsets = [0, 0], sizes = [2, 8], strides = [1, 1]} : vector<2x16xf32> to vector<2x8xf32>
    %134 = arith.mulf %133, %133 : vector<2x8xf32>
    %cst_32 = arith.constant dense<0.000000e+00> : vector<2xf32>
    %135 = vector.multi_reduction <add>, %134, %cst_32 [1] : vector<2x8xf32> to vector<2xf32>
    %136 = vector.shape_cast %135 : vector<2xf32> to vector<2x1xf32>
    %cst_33 = arith.constant 9.99999997E-7 : f32
    %137 = vector.broadcast %cst_33 : f32 to vector<2x1xf32>
    %138 = arith.addf %136, %137 : vector<2x1xf32>
    %139 = math.rsqrt %138 : vector<2x1xf32>
    %140 = vector.broadcast %139 : vector<2x1xf32> to vector<2x8xf32>
    %141 = arith.mulf %133, %140 : vector<2x8xf32>
    %142 = vector.shape_cast %141 : vector<2x8xf32> to vector<2x1x8xf32>
    %143 = vector.broadcast %142 : vector<2x1x8xf32> to vector<2x16x8xf32>
    %144 = arith.mulf %143, %132 : vector<2x16x8xf32>
    %cst_34 = arith.constant dense<0.000000e+00> : vector<2x16xf32>
    %145 = vector.multi_reduction <add>, %144, %cst_34 [2] : vector<2x16x8xf32> to vector<2x16xf32>
    %146 = vector.extract_strided_slice %53 {offsets = [0, 0], sizes = [2, 1], strides = [1, 1]} : vector<2x2xf32> to vector<2x1xf32>
    %147 = vector.broadcast %146 : vector<2x1xf32> to vector<2x16xf32>
    %148 = arith.mulf %147, %145 : vector<2x16xf32>
    %cst_35 = arith.constant dense<0xFF800000> : vector<2xf32>
    %149 = vector.multi_reduction <maximumf>, %148, %cst_35 [1] : vector<2x16xf32> to vector<2xf32>
    %150 = vector.shape_cast %149 : vector<2xf32> to vector<2x1xf32>
    %151 = vector.broadcast %150 : vector<2x1xf32> to vector<2x16xf32>
    %152 = arith.subf %148, %151 : vector<2x16xf32>
    %153 = math.exp %152 : vector<2x16xf32>
    %cst_36 = arith.constant dense<0.000000e+00> : vector<2xf32>
    %154 = vector.multi_reduction <add>, %153, %cst_36 [1] : vector<2x16xf32> to vector<2xf32>
    %155 = vector.shape_cast %154 : vector<2xf32> to vector<2x1xf32>
    %156 = tpu.reciprocal %155 {approx = true} : vector<2x1xf32> -> vector<2x1xf32>
    %157 = vector.broadcast %156 : vector<2x1xf32> to vector<2x16xf32>
    %158 = arith.mulf %153, %157 : vector<2x16xf32>
    %159 = vector.shape_cast %158 : vector<2x16xf32> to vector<2x16x1xf32>
    %160 = vector.broadcast %159 : vector<2x16x1xf32> to vector<2x16x8xf32>
    %161 = arith.mulf %160, %124 : vector<2x16x8xf32>
    %cst_37 = arith.constant dense<0.000000e+00> : vector<2x8xf32>
    %162 = vector.multi_reduction <add>, %161, %cst_37 [1] : vector<2x16x8xf32> to vector<2x8xf32>
    %163 = vector.extract_strided_slice %36 {offsets = [0, 8], sizes = [2, 8], strides = [1, 1]} : vector<2x16xf32> to vector<2x8xf32>
    %164 = arith.mulf %163, %163 : vector<2x8xf32>
    %cst_38 = arith.constant dense<0.000000e+00> : vector<2xf32>
    %165 = vector.multi_reduction <add>, %164, %cst_38 [1] : vector<2x8xf32> to vector<2xf32>
    %166 = vector.shape_cast %165 : vector<2xf32> to vector<2x1xf32>
    %cst_39 = arith.constant 9.99999997E-7 : f32
    %167 = vector.broadcast %cst_39 : f32 to vector<2x1xf32>
    %168 = arith.addf %166, %167 : vector<2x1xf32>
    %169 = math.rsqrt %168 : vector<2x1xf32>
    %170 = vector.broadcast %169 : vector<2x1xf32> to vector<2x8xf32>
    %171 = arith.mulf %163, %170 : vector<2x8xf32>
    %172 = vector.shape_cast %171 : vector<2x8xf32> to vector<2x1x8xf32>
    %173 = vector.broadcast %172 : vector<2x1x8xf32> to vector<2x16x8xf32>
    %174 = arith.mulf %173, %132 : vector<2x16x8xf32>
    %cst_40 = arith.constant dense<0.000000e+00> : vector<2x16xf32>
    %175 = vector.multi_reduction <add>, %174, %cst_40 [2] : vector<2x16x8xf32> to vector<2x16xf32>
    %176 = vector.extract_strided_slice %53 {offsets = [0, 1], sizes = [2, 1], strides = [1, 1]} : vector<2x2xf32> to vector<2x1xf32>
    %177 = vector.broadcast %176 : vector<2x1xf32> to vector<2x16xf32>
    %178 = arith.mulf %177, %175 : vector<2x16xf32>
    %cst_41 = arith.constant dense<0xFF800000> : vector<2xf32>
    %179 = vector.multi_reduction <maximumf>, %178, %cst_41 [1] : vector<2x16xf32> to vector<2xf32>
    %180 = vector.shape_cast %179 : vector<2xf32> to vector<2x1xf32>
    %181 = vector.broadcast %180 : vector<2x1xf32> to vector<2x16xf32>
    %182 = arith.subf %178, %181 : vector<2x16xf32>
    %183 = math.exp %182 : vector<2x16xf32>
    %cst_42 = arith.constant dense<0.000000e+00> : vector<2xf32>
    %184 = vector.multi_reduction <add>, %183, %cst_42 [1] : vector<2x16xf32> to vector<2xf32>
    %185 = vector.shape_cast %184 : vector<2xf32> to vector<2x1xf32>
    %186 = tpu.reciprocal %185 {approx = true} : vector<2x1xf32> -> vector<2x1xf32>
    %187 = vector.broadcast %186 : vector<2x1xf32> to vector<2x16xf32>
    %188 = arith.mulf %183, %187 : vector<2x16xf32>
    %189 = vector.shape_cast %188 : vector<2x16xf32> to vector<2x16x1xf32>
    %190 = vector.broadcast %189 : vector<2x16x1xf32> to vector<2x16x8xf32>
    %191 = arith.mulf %190, %124 : vector<2x16x8xf32>
    %cst_43 = arith.constant dense<0.000000e+00> : vector<2x8xf32>
    %192 = vector.multi_reduction <add>, %191, %cst_43 [1] : vector<2x16x8xf32> to vector<2x8xf32>
    %193 = tpu.concatenate %162, %192 in 1 : vector<2x8xf32>, vector<2x8xf32> -> vector<2x16xf32>
    %c80 = arith.constant 80 : index
    %c0_44 = arith.constant 0 : index
    %194 = vector.load %arg2[%c80, %c0_44] : memref<112x128xf32, #tpu.memory_space<vmem>>, vector<16x128xf32>
    %cst_45 = arith.constant dense<0.000000e+00> : vector<2x128xf32>
    %195 = tpu.matmul %193, %194, %cst_45 {dimension_numbers = #tpu.dot_dimension_numbers<[1], [0], [0], [1], [0, 0, 1, 1], [], []>} : vector<2x16xf32>, vector<16x128xf32>, vector<2x128xf32> -> vector<2x128xf32>
    %196 = vector.extract_strided_slice %195 {offsets = [0, 0], sizes = [2, 32], strides = [1, 1]} : vector<2x128xf32> to vector<2x32xf32>
    %197 = arith.addf %35, %196 : vector<2x32xf32>
    %c0_46 = arith.constant 0 : index
    %c0_47 = arith.constant 0 : index
    %c0_48 = arith.constant 0 : index
    %198 = vector.load %arg5[%c0_46, %c0_47, %c0_48] : memref<1x2x32xf32, #tpu.memory_space<vmem>>, vector<1x2x32xf32>
    %199 = vector.shape_cast %198 : vector<1x2x32xf32> to vector<2x32xf32>
    %200 = vector.shape_cast %197 : vector<2x32xf32> to vector<1x2x32xf32>
    tpu.vector_store %arg5[%c0_46, %c0_47, %c0_48], %200 {strides = array<i32>} : memref<1x2x32xf32, #tpu.memory_space<vmem>>, vector<1x2x32xf32>,
    %201 = tpu.concatenate %29, %27 in 1 : vector<2x32xf32>, vector<2x32xf32> -> vector<2x64xf32>
    %c0_49 = arith.constant 0 : index
    %c0_50 = arith.constant 0 : index
    %202 = vector.load %arg6[%c0_49, %c0_50] : memref<2x64xf32, #tpu.memory_space<vmem>>, vector<2x64xf32>
    tpu.vector_store %arg6[%c0_49, %c0_50], %201 {strides = array<i32>} : memref<2x64xf32, #tpu.memory_space<vmem>>, vector<2x64xf32>,
    %c0_51 = arith.constant 0 : index
    %c0_52 = arith.constant 0 : index
    %c0_53 = arith.constant 0 : index
    %203 = vector.load %arg7[%c0_51, %c0_52, %c0_53] : memref<2x16x8xf32, #tpu.memory_space<vmem>>, vector<2x16x8xf32>
    tpu.vector_store %arg7[%c0_51, %c0_52, %c0_53], %124 {strides = array<i32>} : memref<2x16x8xf32, #tpu.memory_space<vmem>>, vector<2x16x8xf32>,
    return
  }
  func.func @transform_0(%arg0: i32) -> (i32, i32, i32) {
    %c0_i32 = arith.constant 0 : i32
    %c0_i32_0 = arith.constant 0 : i32
    %c0_i32_1 = arith.constant 0 : i32
    return %arg0, %c0_i32, %c0_i32_0 : i32, i32, i32
  }
  func.func @transform_1(%arg0: i32) -> (i32, i32) {
    %c0_i32 = arith.constant 0 : i32
    %c0_i32_0 = arith.constant 0 : i32
    %c0_i32_1 = arith.constant 0 : i32
    return %c0_i32, %c0_i32_0 : i32, i32
  }
  func.func @transform_2(%arg0: i32) -> (i32, i32) {
    %c0_i32 = arith.constant 0 : i32
    %c0_i32_0 = arith.constant 0 : i32
    %c0_i32_1 = arith.constant 0 : i32
    return %c0_i32, %c0_i32_0 : i32, i32
  }
  func.func @transform_3(%arg0: i32) -> (i32, i32, i32) {
    %c0_i32 = arith.constant 0 : i32
    %c0_i32_0 = arith.constant 0 : i32
    %c0_i32_1 = arith.constant 0 : i32
    %c0_i32_2 = arith.constant 0 : i32
    return %c0_i32, %c0_i32_0, %c0_i32_1 : i32, i32, i32
  }
  func.func @transform_4(%arg0: i32) -> (i32, i32, i32) {
    %c0_i32 = arith.constant 0 : i32
    %c0_i32_0 = arith.constant 0 : i32
    %c0_i32_1 = arith.constant 0 : i32
    return %arg0, %c0_i32, %c0_i32_0 : i32, i32, i32
  }
  func.func @transform_5(%arg0: i32) -> (i32, i32) {
    %c0_i32 = arith.constant 0 : i32
    %c0_i32_0 = arith.constant 0 : i32
    %c0_i32_1 = arith.constant 0 : i32
    return %c0_i32, %c0_i32_0 : i32, i32
  }
  func.func @transform_6(%arg0: i32) -> (i32, i32, i32) {
    %c0_i32 = arith.constant 0 : i32
    %c0_i32_0 = arith.constant 0 : i32
    %c0_i32_1 = arith.constant 0 : i32
    %c0_i32_2 = arith.constant 0 : i32
    return %c0_i32, %c0_i32_0, %c0_i32_1 : i32, i32, i32
  }
}

</mosaic_0001>

<llo_original>
// kernel: issharinginputtheproblem_forward.1
$region0: #{issharinginputtheproblem_forward.1}
  #allocation0 [shape = 'u32[]', space=smem, size = 0x4, offset = 0x4, fixed_abs, tag = 'smem constant byte address 0x4 - core index']
  #allocation1 [shape = 'u32[144,128]{1,0:T(1,128)}', space=vmem, size = 0x12000, scoped, tag = 'internal scratch']
  %s0 = inlined_call_operand.vmem [shape: f32[8,2,16], index: 0, kind: input, shape index: {}]
  %s1 = inlined_call_operand.hbm [shape: f32[112,128], index: 1, kind: input, shape index: {}]
  %s2 = inlined_call_operand.vmem [shape: f32[2,64], index: 2, kind: input, shape index: {}, may-alias: {2,5}]
  %s3 = inlined_call_operand.vmem [shape: f32[2,16,8], index: 3, kind: input, shape index: {}, may-alias: {3,6}]
  %s4 = inlined_call_operand.hbm [shape: f32[8,2,32], index: 4, kind: output, shape index: {0}]
  %s5 = inlined_call_operand.vmem [shape: f32[2,64], index: 5, kind: output, shape index: {1}, may-alias: {2,5}]
  %s6 = inlined_call_operand.vmem [shape: f32[2,16,8], index: 6, kind: output, shape index: {2}, may-alias: {3,6}]
  %7 = xla_tuple %s4, %s5, %s6
  %s8 = sld [smem:[#allocation0]]
  $region73: #{issharinginputtheproblem_forward.1} parent=0
    _
  %s10 = ssub.s32 1, %s8
  %s11 = scalar_select 0, %s10, %s8
  $region1: #{issharinginputtheproblem_forward.1} parent=0
    #allocation2 [shape = 'u8[57344]{0}', space=vmem, size = 0xe000, scoped, tag = 'input window, operand 1, single buffered']
    #allocation3 [shape = 's32[2]{0}', space=sflag, size = 0x8, scoped, tag = 'scoped memory for issharinginputtheproblem_forward.1']
    #allocation4 [shape = 's32[2]{0}', space=sflag, size = 0x8, scoped, tag = 'scoped memory for issharinginputtheproblem_forward.1']
    #allocation5 [shape = 'u8[2048]{0}', space=vmem, size = 0x800, scoped, tag = 'output window, operand 0']
    %12 = vsyncpa [#allocation3], 0
    %13 = vsyncpa [#allocation4], 0
    %s14 = scalar_lea.sflag [#allocation4], 1
    %15 = vsyncpa %s14, 0
    loop: start=0, step=1, limit=10
    $region2: #{issharinginputtheproblem_forward.1} parent=1 // loop_pre_header
      _
    $region3: #{issharinginputtheproblem_forward.1} parent=1 // loop_header
      %s17 = sphi 0, %s21
      %p18 = scmp.ge.s32.totalorder %s17, 10
      %s27 = sphi 0, %s29
      %s30 = sphi 0, %s27
      %s31 = sphi 0, %s30
      %s47 = sphi 0, %s31
      %s51 = sphi 0, %s51
      %s53 = sphi 0, %s51
      %s54 = sphi 0, %s53
      %s68 = sphi 0, %s54
      %s72 = sphi 0, %s72
      %s74 = sphi 0, %s72
      %s75 = sphi 0, %s74
      %s89 = sphi 0, %s75
      %s93 = sphi 0, %s93
      %s95 = sphi 0, %s93
      %s96 = sphi 0, %s95
      %s110 = sphi 0, %s96
      %s116 = sphi 0, %s118
      %s119 = sphi 0, %s116
      %s120 = sphi 0, %s119
      %s136 = sphi 0, %s120
      %s140 = sphi 0, %s140
      %s142 = sphi 0, %s140
      %s143 = sphi 0, %s142
      %s157 = sphi 0, %s143
      %s161 = sphi 0, %s161
      %s163 = sphi 0, %s161
      %s164 = sphi 0, %s163
      %s178 = sphi 0, %s164
    $region4: #{issharinginputtheproblem_forward.1} parent=1 // loop_header_branch
      %20 = sbr.rel (%p18) target = $region8
    $region5: #{issharinginputtheproblem_forward.1} parent=1 // loop_body
      %s22 = ssub.s32 %s17, 1
      %s23 = ssub.s32 %s17, 2
      %s24 = sadd.s32 %s17, 1
      %s25 = ssub.s32 %s17, %s24
      %p26 = scmp.eq.s32.totalorder %s25, 0
      %s28 = sadd.s32 %s27, 1
      %s29 = scalar_select %p26, %s27, %s28
      %p32 = pneg %p26
      %p33 = scmp.eq.s32.totalorder %s17, 7
      %p34 = por %p32, %p33
      %p35 = scmp.ne.s32.totalorder %s27, %s30
      %p36 = scmp.eq.s32.totalorder %s17, 0
      %p37 = por %p35, %p36
      %p38 = scmp.ne.s32.totalorder %s27, %s30
      %p39 = scmp.eq.s32.totalorder %s22, 7
      %p40 = por %p38, %p39
      %p41 = scmp.ne.s32.totalorder %s30, %s31
      %p42 = scmp.eq.s32.totalorder %s22, 0
      %p43 = por %p41, %p42
      %p44 = scmp.ne.s32.totalorder %s30, %s31
      %p45 = scmp.eq.s32.totalorder %s23, 7
      %p46 = por %p44, %p45
      %p48 = scmp.ne.s32.totalorder %s31, %s47
      %p49 = scmp.eq.s32.totalorder %s23, 0
      %p50 = por %p48, %p49
      %s52 = sadd.s32 %s51, 1
      %p55 = scmp.eq.s32.totalorder %s17, 7
      %p56 = scmp.ne.s32.totalorder %s51, %s53
      %p57 = scmp.eq.s32.totalorder %s17, 0
      %p58 = por %p56, %p57
      %p59 = scmp.ne.s32.totalorder %s51, %s53
      %p60 = scmp.eq.s32.totalorder %s22, 7
      %p61 = por %p59, %p60
      %p62 = scmp.ne.s32.totalorder %s53, %s54
      %p63 = scmp.eq.s32.totalorder %s22, 0
      %p64 = por %p62, %p63
      %p65 = scmp.ne.s32.totalorder %s53, %s54
      %p66 = scmp.eq.s32.totalorder %s23, 7
      %p67 = por %p65, %p66
      %p69 = scmp.ne.s32.totalorder %s54, %s68
      %p70 = scmp.eq.s32.totalorder %s23, 0
      %p71 = por %p69, %p70
      %s73 = sadd.s32 %s72, 1
      %p76 = scmp.eq.s32.totalorder %s17, 7
      %p77 = scmp.ne.s32.totalorder %s72, %s74
      %p78 = scmp.eq.s32.totalorder %s17, 0
      %p79 = por %p77, %p78
      %p80 = scmp.ne.s32.totalorder %s72, %s74
      %p81 = scmp.eq.s32.totalorder %s22, 7
      %p82 = por %p80, %p81
      %p83 = scmp.ne.s32.totalorder %s74, %s75
      %p84 = scmp.eq.s32.totalorder %s22, 0
      %p85 = por %p83, %p84
      %p86 = scmp.ne.s32.totalorder %s74, %s75
      %p87 = scmp.eq.s32.totalorder %s23, 7
      %p88 = por %p86, %p87
      %p90 = scmp.ne.s32.totalorder %s75, %s89
      %p91 = scmp.eq.s32.totalorder %s23, 0
      %p92 = por %p90, %p91
      %s94 = sadd.s32 %s93, 1
      %p97 = scmp.eq.s32.totalorder %s17, 7
      %p98 = scmp.ne.s32.totalorder %s93, %s95
      %p99 = scmp.eq.s32.totalorder %s17, 0
      %p100 = por %p98, %p99
      %p101 = scmp.ne.s32.totalorder %s93, %s95
      %p102 = scmp.eq.s32.totalorder %s22, 7
      %p103 = por %p101, %p102
      %p104 = scmp.ne.s32.totalorder %s95, %s96
      %p105 = scmp.eq.s32.totalorder %s22, 0
      %p106 = por %p104, %p105
      %p107 = scmp.ne.s32.totalorder %s95, %s96
      %p108 = scmp.eq.s32.totalorder %s23, 7
      %p109 = por %p107, %p108
      %p111 = scmp.ne.s32.totalorder %s96, %s110
      %p112 = scmp.eq.s32.totalorder %s23, 0
      %p113 = por %p111, %p112
      %s114 = ssub.s32 %s17, %s24
      %p115 = scmp.eq.s32.totalorder %s114, 0
      %s117 = sadd.s32 %s116, 1
      %s118 = scalar_select %p115, %s116, %s117
      %p121 = pneg %p115
      %p122 = scmp.eq.s32.totalorder %s17, 7
      %p123 = por %p121, %p122
      %p124 = scmp.ne.s32.totalorder %s116, %s119
      %p125 = scmp.eq.s32.totalorder %s17, 0
      %p126 = por %p124, %p125
      %p127 = scmp.ne.s32.totalorder %s116, %s119
      %p128 = scmp.eq.s32.totalorder %s22, 7
      %p129 = por %p127, %p128
      %p130 = scmp.ne.s32.totalorder %s119, %s120
      %p131 = scmp.eq.s32.totalorder %s22, 0
      %p132 = por %p130, %p131
      %p133 = scmp.ne.s32.totalorder %s119, %s120
      %p134 = scmp.eq.s32.totalorder %s23, 7
      %p135 = por %p133, %p134
      %p137 = scmp.ne.s32.totalorder %s120, %s136
      %p138 = scmp.eq.s32.totalorder %s23, 0
      %p139 = por %p137, %p138
      %s141 = sadd.s32 %s140, 1
      %p144 = scmp.eq.s32.totalorder %s17, 7
      %p145 = scmp.ne.s32.totalorder %s140, %s142
      %p146 = scmp.eq.s32.totalorder %s17, 0
      %p147 = por %p145, %p146
      %p148 = scmp.ne.s32.totalorder %s140, %s142
      %p149 = scmp.eq.s32.totalorder %s22, 7
      %p150 = por %p148, %p149
      %p151 = scmp.ne.s32.totalorder %s142, %s143
      %p152 = scmp.eq.s32.totalorder %s22, 0
      %p153 = por %p151, %p152
      %p154 = scmp.ne.s32.totalorder %s142, %s143
      %p155 = scmp.eq.s32.totalorder %s23, 7
      %p156 = por %p154, %p155
      %p158 = scmp.ne.s32.totalorder %s143, %s157
      %p159 = scmp.eq.s32.totalorder %s23, 0
      %p160 = por %p158, %p159
      %s162 = sadd.s32 %s161, 1
      %p165 = scmp.eq.s32.totalorder %s17, 7
      %p166 = scmp.ne.s32.totalorder %s161, %s163
      %p167 = scmp.eq.s32.totalorder %s17, 0
      %p168 = por %p166, %p167
      %p169 = scmp.ne.s32.totalorder %s161, %s163
      %p170 = scmp.eq.s32.totalorder %s22, 7
      %p171 = por %p169, %p170
      %p172 = scmp.ne.s32.totalorder %s163, %s164
      %p173 = scmp.eq.s32.totalorder %s22, 0
      %p174 = por %p172, %p173
      %p175 = scmp.ne.s32.totalorder %s163, %s164
      %p176 = scmp.eq.s32.totalorder %s23, 7
      %p177 = por %p175, %p176
      %p179 = scmp.ne.s32.totalorder %s164, %s178
      %p180 = scmp.eq.s32.totalorder %s23, 0
      %p181 = por %p179, %p180
      %p182 = scmp.le.s32.totalorder 1, %s17
      %p183 = scmp.lt.s32.totalorder %s17, 9
      %p184 = pnand %p182, %p183
      %p185 = pneg %p184
      // Predicated region
      $region9: #{issharinginputtheproblem_forward.1} parent=5 // pred_check
        _
      $region10: #{issharinginputtheproblem_forward.1} parent=5 // pred_check_branch
        %187 = sbr.rel (%p184) target = $region12
      $region11: #{issharinginputtheproblem_forward.1} parent=5 // pred_region
        %s188 = ssub.s32 %s17, 1
        // Predicated region
        $region13: #{issharinginputtheproblem_forward.1} parent=11 // pred_check
          %p189 = pneg %p64
        $region14: #{issharinginputtheproblem_forward.1} parent=11 // pred_check_branch
          %191 = sbr.rel (%p189) target = $region16
        $region15: #{issharinginputtheproblem_forward.1} parent=11 // pred_region
          %s193 = ssub.s32 1792, 1792
          %194 = vsyncadd [#allocation3], %s193
          %s195 = sshll.u32 [#allocation2], 4
          %s196 = int_to_ptr.vmem [resolvable:$true] %s195
          %201 = dma.hbm_to_vmem [thread:$0]  %s1, 1792, %s196, [#allocation3], 128, 128, 8
        $region16: #{issharinginputtheproblem_forward.1} parent=11 // pred_fallthru
          _
        // Predicated region
        $region17: #{issharinginputtheproblem_forward.1} parent=11 // pred_check
          %p202 = pneg %p85
        $region18: #{issharinginputtheproblem_forward.1} parent=11 // pred_check_branch
          %204 = sbr.rel (%p202) target = $region20
        $region19: #{issharinginputtheproblem_forward.1} parent=11 // pred_region
          _
        $region20: #{issharinginputtheproblem_forward.1} parent=11 // pred_fallthru
          _
        // Predicated region
        $region21: #{issharinginputtheproblem_forward.1} parent=11 // pred_check
          %p205 = pneg %p106
        $region22: #{issharinginputtheproblem_forward.1} parent=11 // pred_check_branch
          %207 = sbr.rel (%p205) target = $region24
        $region23: #{issharinginputtheproblem_forward.1} parent=11 // pred_region
          _
        $region24: #{issharinginputtheproblem_forward.1} parent=11 // pred_fallthru
          _
      $region12: #{issharinginputtheproblem_forward.1} parent=5 // pred_fallthru
        _
      %p208 = scmp.lt.s32.totalorder %s17, 8
      // Predicated region
      $region25: #{issharinginputtheproblem_forward.1} parent=5 // pred_check
        %p209 = pneg %p208
      $region26: #{issharinginputtheproblem_forward.1} parent=5 // pred_check_branch
        %211 = sbr.rel (%p209) target = $region28
      $region27: #{issharinginputtheproblem_forward.1} parent=5 // pred_region
        // Predicated region
        $region29: #{issharinginputtheproblem_forward.1} parent=27 // pred_check
          %p212 = pneg %p37
        $region30: #{issharinginputtheproblem_forward.1} parent=27 // pred_check_branch
          %214 = sbr.rel (%p212) target = $region32
        $region31: #{issharinginputtheproblem_forward.1} parent=27 // pred_region
          %p215 = scmp.lt.s32.totalorder %s17, 7
          %s216 = scalar_select %p215, %s17, 7
          %s217 = smul.addr %s216, 2
          %s218 = scalar_lea.vmem %s0, %s217
        $region32: #{issharinginputtheproblem_forward.1} parent=27 // pred_fallthru
          _
      $region28: #{issharinginputtheproblem_forward.1} parent=5 // pred_fallthru
        _
      %p219 = scmp.le.s32.totalorder 1, %s17
      %p220 = scmp.lt.s32.totalorder %s17, 9
      %p221 = pnand %p219, %p220
      %p222 = pneg %p221
      // Predicated region
      $region33: #{issharinginputtheproblem_forward.1} parent=5 // pred_check
        _
      $region34: #{issharinginputtheproblem_forward.1} parent=5 // pred_check_branch
        %224 = sbr.rel (%p221) target = $region36
      $region35: #{issharinginputtheproblem_forward.1} parent=5 // pred_region
        %s225 = ssub.s32 %s17, 1
        // Predicated region
        $region37: #{issharinginputtheproblem_forward.1} parent=35 // pred_check
          %p226 = pneg %p64
        $region38: #{issharinginputtheproblem_forward.1} parent=35 // pred_check_branch
          %228 = sbr.rel (%p226) target = $region40
        $region39: #{issharinginputtheproblem_forward.1} parent=35 // pred_region
          %229 = dma.done [#allocation3], 1792
        $region40: #{issharinginputtheproblem_forward.1} parent=35 // pred_fallthru
          _
        %p230 = scmp.lt.s32.totalorder %s22, 7
        %s231 = scalar_select %p230, %s22, 7
        %s232 = smul.addr %s231, 2
        %s233 = scalar_lea.vmem %s0, %s232
        %p234 = pneg %p43
        %p235 = pneg %p40
        %p236 = pneg %p64
        %p237 = pneg %p61
        %p238 = pneg %p85
        %p239 = pneg %p82
        %p240 = pneg %p106
        %p241 = pneg %p103
        %p242 = pneg %p132
        %p243 = pneg %p129
        %s244 = sand.u32 %s119, 1
        %s245 = scalar_lea.sflag [#allocation4], %s244
        %s246 = sand.u32 %s119, 1
        %s247 = smul.addr %s246, 2
        %s248 = scalar_lea.vmem [#allocation5], %s247
        %p249 = pneg %p153
        %p250 = pneg %p150
        %p251 = pneg %p174
        %p252 = pneg %p171
        %p253 = scmp.lt.s32.totalorder %s22, 7
        %s254 = scalar_select %p253, %s22, 7
        %s255 = smul.addr %s254, 2
        %s256 = scalar_lea.vmem %s0, %s255
        %p257 = scmp.eq.s32.totalorder %s22, 0
        // Predicated region
        $region41: #{issharinginputtheproblem_forward.1} parent=35 // pred_check
          %p258 = pneg %p257
        $region42: #{issharinginputtheproblem_forward.1} parent=35 // pred_check_branch
          %260 = sbr.rel (%p258) target = $region44
        $region43: #{issharinginputtheproblem_forward.1} parent=35 // pred_region
          %v261 = vld [vmem:[%s2] sm:$0x3]
          %vm262 = vcmask 517120
          %263 = vst.msk [vmem:[%s5] sm:$0x3] %vm262, %v261
          %v264 = vld [vmem:[%s3] sm:$0xff]
          %v265 = vld [vmem:[%s3 + $0x8] sm:$0xff]
          %v266 = vld [vmem:[%s3 + $0x10] sm:$0xff]
          %v267 = vld [vmem:[%s3 + $0x18] sm:$0xff]
          %vm268 = vcmask 64512
          %269 = vst.msk [vmem:[%s6] sm:$0xff] %vm268, %v264
          %270 = vst.msk [vmem:[%s6 + $0x8] sm:$0xff] %vm268, %v265
          %271 = vst.msk [vmem:[%s6 + $0x10] sm:$0xff] %vm268, %v266
          %272 = vst.msk [vmem:[%s6 + $0x18] sm:$0xff] %vm268, %v267
        $region44: #{issharinginputtheproblem_forward.1} parent=35 // pred_fallthru
          _
        %v273 = vld [vmem:[%s256] sm:$0x3]
        %v274 = vld [vmem:[%s5] sm:$0x3]
        %v275 = vld [vmem:[%s6] sm:$0xff]
        %v276 = vld [vmem:[%s6 + $0x8] sm:$0xff]
        %v277 = vld [vmem:[%s6 + $0x10] sm:$0xff]
        %v278 = vld [vmem:[%s6 + $0x18] sm:$0xff]
        %280 = vrot.lane.b32.xlu0 %v274, 16
        %v281 = vpop.permute.xlu0 %280
        %vm283 = vcmask 130048
        %v284 = vsel %vm283, %v273, %v281
        %v285 = vld [vmem:[#allocation2] sm:$0xff]
        %v286 = vld [vmem:[#allocation2 + $0x8] sm:$0xff]
        %v287 = vld [vmem:[#allocation2 + $0x10] sm:$0xff]
        %v288 = vld [vmem:[#allocation2 + $0x18] sm:$0xff]
        %v289 = vld [vmem:[#allocation2 + $0x20] sm:$0xff]
        %v290 = vld [vmem:[#allocation2 + $0x28] sm:$0xff]
        %v291 = vld [vmem:[#allocation2 + $0x60] sm:$0x1]
        %v292 = vlaneseq
        %v293 = vshrl.u32 %v292, 7
        %v294 = vsub.s32 0, %v293
        %v295 = vrot.slane %v291, %v294
        %vm296 = vcmask 392192
        %v298 = vsel %vm296, %v284, 0
        %300 = vmatprep.subr.mxu0 0.0
        %301 = vmatpush1.msra.mxu0 %v285
        %302 = vmatprep.subr.mxu0 0.0
        %303 = vmatpush1.msra.mxu0 %v286
        %304 = vmatprep.subr.mxu0 0.0
        %305 = vmatpush1.msra.mxu0 %v287
        %306 = vmatprep.subr.mxu0 0.0
        %307 = vmatpush1.msra.mxu0 %v288
        %308 = vmatprep.subr.mxu0 0.0
        %309 = vmatpush1.msra.mxu0 %v289
        %310 = vmatprep.subr.mxu0 0.0
        %311 = vmatpush1.msra.mxu0 %v290
        %312 = vmatprep.subr.mxu0 0.0
        %313 = vmatpush1.msra.mxu0 0.0
        %314 = vmatprep.subr.mxu0 0.0
        %315 = vmatpush1.msra.mxu0 0.0
        %316 = vmatprep.subr.mxu0 0.0
        %317 = vmatpush1.msra.mxu0 0.0
        %318 = vmatprep.subr.mxu0 0.0
        %319 = vmatpush1.msra.mxu0 0.0
        %320 = vmatprep.subr.mxu0 0.0
        %321 = vmatpush1.msra.mxu0 0.0
        %322 = vmatprep.subr.mxu0 0.0
        %323 = vmatpush1.msra.mxu0 0.0
        %324 = vmatprep.subr.mxu0 0.0
        %325 = vmatpush1.msra.mxu0 0.0
        %326 = vmatprep.subr.mxu0 0.0
        %327 = vmatpush1.msra.mxu0 0.0
        %328 = vmatprep.subr.mxu0 0.0
        %329 = vmatpush1.msra.mxu0 0.0
        %330 = vmatprep.subr.mxu0 0.0
        %331 = vmatpush1.msra.mxu0 0.0
        %332 = vmatprep.subr.mxu0 0.0
        %333 = vmatpush1.msra.mxu0 0.0
        %334 = vmatprep.subr.mxu0 0.0
        %335 = vmatpush1.msra.mxu0 0.0
        %336 = vmatprep.subr.mxu0 0.0
        %337 = vmatpush1.msra.mxu0 0.0
        %338 = vmatprep.subr.mxu0 0.0
        %339 = vmatpush1.msra.mxu0 0.0
        %340 = vmatprep.subr.mxu0 0.0
        %341 = vmatpush1.msra.mxu0 0.0
        %342 = vmatprep.subr.mxu0 0.0
        %343 = vmatpush1.msra.mxu0 0.0
        %344 = vmatprep.subr.mxu0 0.0
        %345 = vmatpush1.msra.mxu0 0.0
        %346 = vmatprep.subr.mxu0 0.0
        %347 = vmatpush1.msra.mxu0 0.0
        %348 = vmatprep.subr.mxu0 0.0
        %349 = vmatpush1.msra.mxu0 0.0
        %350 = vmatprep.subr.mxu0 0.0
        %351 = vmatpush1.msra.mxu0 0.0
        %352 = vmatprep.subr.mxu0 0.0
        %353 = vmatpush1.msra.mxu0 0.0
        %354 = vmatprep.subr.mxu0 0.0
        %355 = vmatpush1.msra.mxu0 0.0
        %356 = vmatprep.subr.mxu0 0.0
        %357 = vmatpush1.msra.mxu0 0.0
        %358 = vmatprep.subr.mxu0 0.0
        %359 = vmatpush1.msra.mxu0 0.0
        %360 = vmatprep.subr.mxu0 0.0
        %361 = vmatpush1.msra.mxu0 0.0
        %362 = vmatprep.subr.mxu0 0.0
        %363 = vmatpush1.msra.mxu0 0.0
        %364 = vmatprep.mubr.f32.mxu0 0.0
        %365 = vmatmul.mubr.f32.gmra.mrb[0].mxu0 %v298
        %v366 = vpop.f32.mrb[0].mxu0
        %v367 = vadd.f32 %v295, %v366
        %v368 = vpop.f32.mrb[0].mxu0
        %369 = vdwg.mxu0
        %v370 = vxor.u32 %v367, 2147483648
        %v371 = vmul.f32 %v370, 1.442695
        %v372 = vpow.pop %v371
        %v373 = vadd.f32 %v372, 1.0
        %v374 = vrcp.pop %v373
        %v375 = vmul.f32 1.0, %v374
        %v376 = vtanh.pop %v367
        %v377 = vmul.f32 %v375, %v274
        %379 = vrot.lane.b32.xlu0 %v376, 64
        %v380 = vpop.permute.xlu0 %379
        %v382 = vmul.f32 %v375, %v380
        %384 = vrot.lane.b32.xlu0 %v382, 32
        %v385 = vpop.permute.xlu0 %384
        %v387 = vadd.f32 %v377, %v385
        %v388 = vtanh.pop %v387
        %390 = vrot.lane.b32.xlu0 %v388, 64
        %v391 = vpop.permute.xlu0 %390
        %v393 = vmul.f32 %v375, %v391
        %v394 = vld [vmem:[#allocation2 + $0x30] sm:$0xff]
        %v395 = vld [vmem:[#allocation2 + $0x38] sm:$0xff]
        %v396 = vld [vmem:[#allocation2 + $0x40] sm:$0xff]
        %v397 = vld [vmem:[#allocation2 + $0x48] sm:$0xff]
        %v398 = vld [vmem:[#allocation2 + $0x68] sm:$0x1]
        %v399 = vlaneseq
        %v400 = vshrl.u32 %v399, 7
        %v401 = vsub.s32 0, %v400
        %v402 = vrot.slane %v398, %v401
        %404 = vrot.lane.b32.xlu0 %v393, 32
        %v405 = vpop.permute.xlu0 %404
        %vm406 = vcmask 261120
        %v407 = vsel %vm406, %v405, 0
        %409 = vmatprep.subr.mxu0 0.0
        %410 = vmatpush1.msra.mxu0 %v394
        %411 = vmatprep.subr.mxu0 0.0
        %412 = vmatpush1.msra.mxu0 %v395
        %413 = vmatprep.subr.mxu0 0.0
        %414 = vmatpush1.msra.mxu0 %v396
        %415 = vmatprep.subr.mxu0 0.0
        %416 = vmatpush1.msra.mxu0 %v397
        %417 = vmatprep.subr.mxu0 0.0
        %418 = vmatpush1.msra.mxu0 0.0
        %419 = vmatprep.subr.mxu0 0.0
        %420 = vmatpush1.msra.mxu0 0.0
        %421 = vmatprep.subr.mxu0 0.0
        %422 = vmatpush1.msra.mxu0 0.0
        %423 = vmatprep.subr.mxu0 0.0
        %424 = vmatpush1.msra.mxu0 0.0
        %425 = vmatprep.subr.mxu0 0.0
        %426 = vmatpush1.msra.mxu0 0.0
        %427 = vmatprep.subr.mxu0 0.0
        %428 = vmatpush1.msra.mxu0 0.0
        %429 = vmatprep.subr.mxu0 0.0
        %430 = vmatpush1.msra.mxu0 0.0
        %431 = vmatprep.subr.mxu0 0.0
        %432 = vmatpush1.msra.mxu0 0.0
        %433 = vmatprep.subr.mxu0 0.0
        %434 = vmatpush1.msra.mxu0 0.0
        %435 = vmatprep.subr.mxu0 0.0
        %436 = vmatpush1.msra.mxu0 0.0
        %437 = vmatprep.subr.mxu0 0.0
        %438 = vmatpush1.msra.mxu0 0.0
        %439 = vmatprep.subr.mxu0 0.0
        %440 = vmatpush1.msra.mxu0 0.0
        %441 = vmatprep.subr.mxu0 0.0
        %442 = vmatpush1.msra.mxu0 0.0
        %443 = vmatprep.subr.mxu0 0.0
        %444 = vmatpush1.msra.mxu0 0.0
        %445 = vmatprep.subr.mxu0 0.0
        %446 = vmatpush1.msra.mxu0 0.0
        %447 = vmatprep.subr.mxu0 0.0
        %448 = vmatpush1.msra.mxu0 0.0
        %449 = vmatprep.subr.mxu0 0.0
        %450 = vmatpush1.msra.mxu0 0.0
        %451 = vmatprep.subr.mxu0 0.0
        %452 = vmatpush1.msra.mxu0 0.0
        %453 = vmatprep.subr.mxu0 0.0
        %454 = vmatpush1.msra.mxu0 0.0
        %455 = vmatprep.subr.mxu0 0.0
        %456 = vmatpush1.msra.mxu0 0.0
        %457 = vmatprep.subr.mxu0 0.0
        %458 = vmatpush1.msra.mxu0 0.0
        %459 = vmatprep.subr.mxu0 0.0
        %460 = vmatpush1.msra.mxu0 0.0
        %461 = vmatprep.subr.mxu0 0.0
        %462 = vmatpush1.msra.mxu0 0.0
        %463 = vmatprep.subr.mxu0 0.0
        %464 = vmatpush1.msra.mxu0 0.0
        %465 = vmatprep.subr.mxu0 0.0
        %466 = vmatpush1.msra.mxu0 0.0
        %467 = vmatprep.subr.mxu0 0.0
        %468 = vmatpush1.msra.mxu0 0.0
        %469 = vmatprep.subr.mxu0 0.0
        %470 = vmatpush1.msra.mxu0 0.0
        %471 = vmatprep.subr.mxu0 0.0
        %472 = vmatpush1.msra.mxu0 0.0
        %473 = vmatprep.mubr.f32.mxu0 0.0
        %474 = vmatmul.mubr.f32.gmra.mrb[0].mxu0 %v407
        %v475 = vpop.f32.mrb[0].mxu0
        %v476 = vadd.f32 %v402, %v475
        %v477 = vpop.f32.mrb[0].mxu0
        %478 = vdwg.mxu0
        %v479 = vmax.f32 %v476, 0.0
        %vm480 = vcmp.ne.f32.partialorder %v476, %v476
        %v481 = vadd.f32 %v476, 0.0
        %v482 = vand.u32 2147483647, %v476
        %v483 = vsub.f32 0.0, %v482
        %v484 = vmul.f32 %v483, 1.442695
        %v485 = vpow.pop %v484
        %v486 = vadd.f32 %v485, 1.0
        %v487 = vlog2.pop %v486
        %v488 = vmul.f32 %v487, 0.6931472
        %v489 = vmul.f32 -0.5, %v485
        %v490 = vadd.f32 %v489, 1.0
        %v491 = vmul.f32 %v490, %v485
        %v492 = vand.u32 2147483647, %v485
        %vm493 = vcmp.lt.f32.partialorder %v492, 0.0004427343
        %v494 = vsel %vm493, %v491, %v488
        %v495 = vadd.f32 %v479, %v494
        %v496 = vsel %vm480, %v481, %v495
        %v497 = vadd.f32 %v496, 1.0
        %v498 = vxor.u32 %v476, 2147483648
        %v499 = vmul.f32 %v498, 1.442695
        %v500 = vpow.pop %v499
        %v501 = vadd.f32 %v500, 1.0
        %v502 = vrcp.pop %v501
        %v503 = vmul.f32 1.0, %v502
        %v504 = vmul.f32 %v275, %v275
        %v505 = vmul.f32 %v276, %v276
        %v506 = vmul.f32 %v277, %v277
        %v507 = vmul.f32 %v278, %v278
        %vm508 = vcmask 64512
        %v509 = vsel %vm508, %v504, 0.0
        %510 = vadd.xlane.f32.xlu0 %v509
        %v511 = vpop.xlane.xlu0 %510
        %v512 = vsel %vm508, %v505, 0.0
        %513 = vadd.xlane.f32.xlu0 %v512
        %v514 = vpop.xlane.xlu0 %513
        %v515 = vsel %vm508, %v506, 0.0
        %516 = vadd.xlane.f32.xlu0 %v515
        %v517 = vpop.xlane.xlu0 %516
        %v518 = vsel %vm508, %v507, 0.0
        %519 = vadd.xlane.f32.xlu0 %v518
        %v520 = vpop.xlane.xlu0 %519
        %v521 = vadd.f32 %v511, 1e-06
        %v522 = vadd.f32 %v514, 1e-06
        %v523 = vadd.f32 %v517, 1e-06
        %v524 = vadd.f32 %v520, 1e-06
        %v525 = vrsqrt.pop %v521
        %v526 = vrsqrt.pop %v522
        %v527 = vrsqrt.pop %v523
        %v528 = vrsqrt.pop %v524
        %v529 = vmul.f32 %v275, %v525
        %v530 = vmul.f32 %v276, %v526
        %v531 = vmul.f32 %v277, %v527
        %v532 = vmul.f32 %v278, %v528
        %v533 = vmul.f32 %v476, %v476
        %535 = vrot.lane.b32.xlu0 %v533, 78
        %v536 = vpop.permute.xlu0 %535
        %vm538 = vcmask 58368
        %v539 = vsel %vm538, %v536, 0.0
        %540 = vadd.xlane.f32.xlu0 %v539
        %v541 = vpop.xlane.xlu0 %540
        %v542 = vadd.f32 %v541, 1e-06
        %v543 = vrsqrt.pop %v542
        %v544 = vmul.f32 %v476, %v543
        %v547 = vunpack.c.l.s4 1966171168
        %v548 = vunpack.c.0.s8 %v547
        %v549 = vlaneseq
        %v550 = vshrl.u32 %v549, 7
        %v551 = vsub.s32 %v548, %v550
        %v552 = vrot.slane %v544, %v551
        %v553 = vcombine.high %v552, %v552
        %v555 = vunpack.c.l.s4 1966171168
        %v556 = vunpack.c.0.s8 %v555
        %v557 = vlaneseq
        %v558 = vshrl.u32 %v557, 7
        %v559 = vsub.s32 %v556, %v558
        %v560 = vrot.slane %v552, %v559
        %v562 = vunpack.c.l.s4 1966171168
        %v563 = vunpack.c.0.s8 %v562
        %v564 = vlaneseq
        %v565 = vshrl.u32 %v564, 7
        %v566 = vsub.s32 %v563, %v565
        %v567 = vrot.slane %v553, %v566
        %v568 = vlaneseq
        %v569 = vshrl.u32 %v568, 7
        %v570 = vsub.s32 0, %v569
        %v571 = vrot.slane %v560, %v570
        %v572 = vlaneseq
        %v573 = vshrl.u32 %v572, 7
        %v574 = vsub.s32 0, %v573
        %v575 = vrot.slane %v567, %v574
        %576 = vrot.lane.b32.xlu0 %v571, 78
        %v577 = vpop.permute.xlu0 %576
        %578 = vrot.lane.b32.xlu0 %v575, 78
        %v579 = vpop.permute.xlu0 %578
        %v582 = vmul.f32 %v529, %v577
        %v583 = vmul.f32 %v530, %v577
        %v584 = vmul.f32 %v531, %v579
        %v585 = vmul.f32 %v532, %v579
        %v586 = vsel %vm508, %v582, 0.0
        %587 = vadd.xlane.f32.xlu0 %v586
        %v588 = vpop.xlane.xlu0 %587
        %v589 = vsel %vm508, %v583, 0.0
        %590 = vadd.xlane.f32.xlu0 %v589
        %v591 = vpop.xlane.xlu0 %590
        %v592 = vsel %vm508, %v584, 0.0
        %593 = vadd.xlane.f32.xlu0 %v592
        %v594 = vpop.xlane.xlu0 %593
        %v595 = vsel %vm508, %v585, 0.0
        %596 = vadd.xlane.f32.xlu0 %v595
        %v597 = vpop.xlane.xlu0 %596
        %599 = vset.pattern.permute.xlu0 58
        %600 = vperm.xlu0 %599, %v497
        %v601 = vpop.permute.xlu0 %600
        %v607 = vlaneseq
        %v608 = vand.u32 %v607, 127
        %v609 = vlaneseq
        %v610 = vshrl.u32 %v609, 7
        %v611 = vsub.s32 %v608, %v610
        %v612 = vrot.slane %v588, %v611
        %v613 = vadd.s32 %v608, 4294967288
        %v614 = vlaneseq
        %v615 = vshrl.u32 %v614, 7
        %v616 = vsub.s32 %v613, %v615
        %v617 = vrot.slane %v591, %v616
        %vm618 = vcmask 130112
        %v619 = vsel %vm618, %v617, %v612
        %v620 = vlaneseq
        %v621 = vshrl.u32 %v620, 7
        %v622 = vsub.s32 %v608, %v621
        %v623 = vrot.slane %v594, %v622
        %v624 = vlaneseq
        %v625 = vshrl.u32 %v624, 7
        %v626 = vsub.s32 %v613, %v625
        %v627 = vrot.slane %v597, %v626
        %v628 = vsel %vm618, %v627, %v623
        %vm629 = vcmask 1041409
        %v630 = vsel %vm629, %v628, %v619
        %v632 = vmul.f32 %v601, %v630
        %vm633 = vcmask 123904
        %v634 = vsel %vm633, %v632, -inf
        %635 = vmax.xlane.f32.xlu0 %v634
        %v636 = vpop.xlane.xlu0 %635
        %v637 = vsub.f32 %v632, %v636
        %v638 = vmul.f32 %v637, 1.442695
        %v639 = vpow.pop %v638
        %v640 = vsel %vm633, %v639, 0.0
        %641 = vadd.xlane.f32.xlu0 %v640
        %v642 = vpop.xlane.xlu0 %641
        %v643 = vrcp.pop %v642
        %v644 = vmul.f32 %v639, %v643
        %v645 = vlaneseq
        %v646 = vshrl.u32 %v645, 7
        %v647 = vsub.s32 0, %v646
        %v648 = vrot.slane %v644, %v647
        %650 = vbcast.lane.b32.xlu0 %v648, 256
        %v651 = vpop.permute.xlu0 %650
        %s653 = sor.u32 256, 8
        %654 = vbcast.lane.b32.xlu0 %v648, %s653
        %v655 = vpop.permute.xlu0 %654
        %v656 = vlaneseq
        %v657 = vshrl.u32 %v656, 7
        %v658 = vsub.s32 1, %v657
        %v659 = vrot.slane %v644, %v658
        %661 = vbcast.lane.b32.xlu0 %v659, 256
        %v662 = vpop.permute.xlu0 %661
        %s664 = sor.u32 256, 8
        %665 = vbcast.lane.b32.xlu0 %v659, %s664
        %v666 = vpop.permute.xlu0 %665
        %v669 = vunpack.c.l.s4 1966171168
        %v670 = vunpack.c.0.s8 %v669
        %v671 = vlaneseq
        %v672 = vshrl.u32 %v671, 7
        %v673 = vsub.s32 %v670, %v672
        %v674 = vrot.slane %v503, %v673
        %v675 = vcombine.high %v674, %v674
        %v677 = vunpack.c.l.s4 1966171168
        %v678 = vunpack.c.0.s8 %v677
        %v679 = vlaneseq
        %v680 = vshrl.u32 %v679, 7
        %v681 = vsub.s32 %v678, %v680
        %v682 = vrot.slane %v674, %v681
        %v684 = vunpack.c.l.s4 1966171168
        %v685 = vunpack.c.0.s8 %v684
        %v686 = vlaneseq
        %v687 = vshrl.u32 %v686, 7
        %v688 = vsub.s32 %v685, %v687
        %v689 = vrot.slane %v675, %v688
        %v690 = vlaneseq
        %v691 = vshrl.u32 %v690, 7
        %v692 = vsub.s32 0, %v691
        %v693 = vrot.slane %v682, %v692
        %v694 = vlaneseq
        %v695 = vshrl.u32 %v694, 7
        %v696 = vsub.s32 0, %v695
        %v697 = vrot.slane %v689, %v696
        %v700 = vmul.f32 %v651, %v693
        %v701 = vmul.f32 %v655, %v693
        %v702 = vmul.f32 %v662, %v697
        %v703 = vmul.f32 %v666, %v697
        %v704 = vsub.f32 1.0, %v700
        %v705 = vsub.f32 1.0, %v701
        %v706 = vsub.f32 1.0, %v702
        %v707 = vsub.f32 1.0, %v703
        %712 = vrot.lane.b32.xlu0 %v704, 69
        %v713 = vpop.permute.xlu0 %712
        %714 = vrot.lane.b32.xlu0 %v705, 69
        %v715 = vpop.permute.xlu0 %714
        %716 = vrot.lane.b32.xlu0 %v706, 69
        %v717 = vpop.permute.xlu0 %716
        %718 = vrot.lane.b32.xlu0 %v707, 69
        %v719 = vpop.permute.xlu0 %718
        %v724 = vmul.f32 %v275, %v713
        %v725 = vmul.f32 %v276, %v715
        %v726 = vmul.f32 %v277, %v717
        %v727 = vmul.f32 %v278, %v719
        %v730 = vunpack.c.l.s4 1966171168
        %v731 = vunpack.c.0.s8 %v730
        %v732 = vlaneseq
        %v733 = vshrl.u32 %v732, 7
        %v734 = vsub.s32 %v731, %v733
        %v735 = vrot.slane %v476, %v734
        %v736 = vcombine.high %v735, %v735
        %v738 = vunpack.c.l.s4 1966171168
        %v739 = vunpack.c.0.s8 %v738
        %v740 = vlaneseq
        %v741 = vshrl.u32 %v740, 7
        %v742 = vsub.s32 %v739, %v741
        %v743 = vrot.slane %v735, %v742
        %v745 = vunpack.c.l.s4 1966171168
        %v746 = vunpack.c.0.s8 %v745
        %v747 = vlaneseq
        %v748 = vshrl.u32 %v747, 7
        %v749 = vsub.s32 %v746, %v748
        %v750 = vrot.slane %v736, %v749
        %v751 = vlaneseq
        %v752 = vshrl.u32 %v751, 7
        %v753 = vsub.s32 0, %v752
        %v754 = vrot.slane %v743, %v753
        %v755 = vlaneseq
        %v756 = vshrl.u32 %v755, 7
        %v757 = vsub.s32 0, %v756
        %v758 = vrot.slane %v750, %v757
        %v761 = vmul.f32 %v651, %v754
        %v762 = vmul.f32 %v655, %v754
        %v763 = vmul.f32 %v662, %v758
        %v764 = vmul.f32 %v666, %v758
        %769 = vrot.lane.b32.xlu0 %v761, 61
        %v770 = vpop.permute.xlu0 %769
        %771 = vrot.lane.b32.xlu0 %v762, 61
        %v772 = vpop.permute.xlu0 %771
        %773 = vrot.lane.b32.xlu0 %v763, 61
        %v774 = vpop.permute.xlu0 %773
        %775 = vrot.lane.b32.xlu0 %v764, 61
        %v776 = vpop.permute.xlu0 %775
        %v781 = vadd.f32 %v724, %v770
        %v782 = vadd.f32 %v725, %v772
        %v783 = vadd.f32 %v726, %v774
        %v784 = vadd.f32 %v727, %v776
        %v785 = vmul.f32 %v781, %v781
        %v786 = vmul.f32 %v782, %v782
        %v787 = vmul.f32 %v783, %v783
        %v788 = vmul.f32 %v784, %v784
        %v789 = vsel %vm508, %v785, 0.0
        %790 = vadd.xlane.f32.xlu0 %v789
        %v791 = vpop.xlane.xlu0 %790
        %v792 = vsel %vm508, %v786, 0.0
        %793 = vadd.xlane.f32.xlu0 %v792
        %v794 = vpop.xlane.xlu0 %793
        %v795 = vsel %vm508, %v787, 0.0
        %796 = vadd.xlane.f32.xlu0 %v795
        %v797 = vpop.xlane.xlu0 %796
        %v798 = vsel %vm508, %v788, 0.0
        %799 = vadd.xlane.f32.xlu0 %v798
        %v800 = vpop.xlane.xlu0 %799
        %v801 = vadd.f32 %v791, 1e-06
        %v802 = vadd.f32 %v794, 1e-06
        %v803 = vadd.f32 %v797, 1e-06
        %v804 = vadd.f32 %v800, 1e-06
        %v805 = vrsqrt.pop %v801
        %v806 = vrsqrt.pop %v802
        %v807 = vrsqrt.pop %v803
        %v808 = vrsqrt.pop %v804
        %v809 = vmul.f32 %v781, %v805
        %v810 = vmul.f32 %v782, %v806
        %v811 = vmul.f32 %v783, %v807
        %v812 = vmul.f32 %v784, %v808
        %813 = vrot.lane.b32.xlu0 %v533, 96
        %v814 = vpop.permute.xlu0 %813
        %v816 = vsel %vm538, %v814, 0.0
        %817 = vadd.xlane.f32.xlu0 %v816
        %v818 = vpop.xlane.xlu0 %817
        %v819 = vadd.f32 %v818, 1e-06
        %v820 = vrsqrt.pop %v819
        %v821 = vmul.f32 %v476, %v820
        %v824 = vunpack.c.l.s4 1966171168
        %v825 = vunpack.c.0.s8 %v824
        %v826 = vlaneseq
        %v827 = vshrl.u32 %v826, 7
        %v828 = vsub.s32 %v825, %v827
        %v829 = vrot.slane %v821, %v828
        %v830 = vcombine.high %v829, %v829
        %v832 = vunpack.c.l.s4 1966171168
        %v833 = vunpack.c.0.s8 %v832
        %v834 = vlaneseq
        %v835 = vshrl.u32 %v834, 7
        %v836 = vsub.s32 %v833, %v835
        %v837 = vrot.slane %v829, %v836
        %v839 = vunpack.c.l.s4 1966171168
        %v840 = vunpack.c.0.s8 %v839
        %v841 = vlaneseq
        %v842 = vshrl.u32 %v841, 7
        %v843 = vsub.s32 %v840, %v842
        %v844 = vrot.slane %v830, %v843
        %v845 = vlaneseq
        %v846 = vshrl.u32 %v845, 7
        %v847 = vsub.s32 0, %v846
        %v848 = vrot.slane %v837, %v847
        %v849 = vlaneseq
        %v850 = vshrl.u32 %v849, 7
        %v851 = vsub.s32 0, %v850
        %v852 = vrot.slane %v844, %v851
        %859 = vrot.lane.b32.xlu0 %v809, 32
        %v860 = vpop.permute.xlu0 %859
        %861 = vrot.lane.b32.xlu0 %v810, 32
        %v862 = vpop.permute.xlu0 %861
        %863 = vrot.lane.b32.xlu0 %v811, 32
        %v864 = vpop.permute.xlu0 %863
        %865 = vrot.lane.b32.xlu0 %v812, 32
        %v866 = vpop.permute.xlu0 %865
        %v871 = vmul.f32 %v848, %v860
        %v872 = vmul.f32 %v848, %v862
        %v873 = vmul.f32 %v852, %v864
        %v874 = vmul.f32 %v852, %v866
        %879 = vrot.lane.b32.xlu0 %v871, 96
        %v880 = vpop.permute.xlu0 %879
        %881 = vrot.lane.b32.xlu0 %v872, 96
        %v882 = vpop.permute.xlu0 %881
        %883 = vrot.lane.b32.xlu0 %v873, 96
        %v884 = vpop.permute.xlu0 %883
        %885 = vrot.lane.b32.xlu0 %v874, 96
        %v886 = vpop.permute.xlu0 %885
        %v891 = vsel %vm508, %v880, 0.0
        %892 = vadd.xlane.f32.xlu0 %v891
        %v893 = vpop.xlane.xlu0 %892
        %v894 = vsel %vm508, %v882, 0.0
        %895 = vadd.xlane.f32.xlu0 %v894
        %v896 = vpop.xlane.xlu0 %895
        %v897 = vsel %vm508, %v884, 0.0
        %898 = vadd.xlane.f32.xlu0 %v897
        %v899 = vpop.xlane.xlu0 %898
        %v900 = vsel %vm508, %v886, 0.0
        %901 = vadd.xlane.f32.xlu0 %v900
        %v902 = vpop.xlane.xlu0 %901
        %903 = vset.pattern.permute.xlu0 48
        %904 = vperm.xlu0 %903, %v497
        %v905 = vpop.permute.xlu0 %904
        %v911 = vlaneseq
        %v912 = vshrl.u32 %v911, 7
        %v913 = vsub.s32 %v608, %v912
        %v914 = vrot.slane %v893, %v913
        %v915 = vlaneseq
        %v916 = vshrl.u32 %v915, 7
        %v917 = vsub.s32 %v613, %v916
        %v918 = vrot.slane %v896, %v917
        %v919 = vsel %vm618, %v918, %v914
        %v920 = vlaneseq
        %v921 = vshrl.u32 %v920, 7
        %v922 = vsub.s32 %v608, %v921
        %v923 = vrot.slane %v899, %v922
        %v924 = vlaneseq
        %v925 = vshrl.u32 %v924, 7
        %v926 = vsub.s32 %v613, %v925
        %v927 = vrot.slane %v902, %v926
        %v928 = vsel %vm618, %v927, %v923
        %v929 = vsel %vm629, %v928, %v919
        %v931 = vmul.f32 %v905, %v929
        %v932 = vsel %vm633, %v931, -inf
        %933 = vmax.xlane.f32.xlu0 %v932
        %v934 = vpop.xlane.xlu0 %933
        %v935 = vsub.f32 %v931, %v934
        %v936 = vmul.f32 %v935, 1.442695
        %v937 = vpow.pop %v936
        %v938 = vsel %vm633, %v937, 0.0
        %939 = vadd.xlane.f32.xlu0 %v938
        %v940 = vpop.xlane.xlu0 %939
        %v941 = vrcp.pop %v940
        %v942 = vmul.f32 %v937, %v941
        %v943 = vlaneseq
        %v944 = vshrl.u32 %v943, 7
        %v945 = vsub.s32 0, %v944
        %v946 = vrot.slane %v942, %v945
        %948 = vbcast.lane.b32.xlu0 %v946, 256
        %v949 = vpop.permute.xlu0 %948
        %s951 = sor.u32 256, 8
        %952 = vbcast.lane.b32.xlu0 %v946, %s951
        %v953 = vpop.permute.xlu0 %952
        %v954 = vlaneseq
        %v955 = vshrl.u32 %v954, 7
        %v956 = vsub.s32 1, %v955
        %v957 = vrot.slane %v942, %v956
        %959 = vbcast.lane.b32.xlu0 %v957, 256
        %v960 = vpop.permute.xlu0 %959
        %s962 = sor.u32 256, 8
        %963 = vbcast.lane.b32.xlu0 %v957, %s962
        %v964 = vpop.permute.xlu0 %963
        %v965 = vmul.f32 %v949, %v781
        %v966 = vmul.f32 %v953, %v782
        %v967 = vmul.f32 %v960, %v783
        %v968 = vmul.f32 %v964, %v784
        %v969 = vsel %vm508, %v965, 0.0
        %v970 = vsel %vm508, %v966, 0.0
        %v971 = vadd.f32 %v969, %v970
        %v972 = vrot.slane %v971, 4
        %v973 = vadd.f32 %v971, %v972
        %v974 = vrot.slane %v973, 2
        %v975 = vadd.f32 %v973, %v974
        %v976 = vrot.slane %v975, 1
        %v977 = vadd.f32 %v975, %v976
        %v978 = vsel %vm508, %v967, 0.0
        %v979 = vsel %vm508, %v968, 0.0
        %v980 = vadd.f32 %v978, %v979
        %v981 = vrot.slane %v980, 4
        %v982 = vadd.f32 %v980, %v981
        %v983 = vrot.slane %v982, 2
        %v984 = vadd.f32 %v982, %v983
        %v985 = vrot.slane %v984, 1
        %v986 = vadd.f32 %v984, %v985
        %987 = vrot.lane.b32.xlu0 %v533, 88
        %v988 = vpop.permute.xlu0 %987
        %v990 = vsel %vm538, %v988, 0.0
        %991 = vadd.xlane.f32.xlu0 %v990
        %v992 = vpop.xlane.xlu0 %991
        %v993 = vadd.f32 %v992, 1e-06
        %v994 = vrsqrt.pop %v993
        %v995 = vmul.f32 %v476, %v994
        %v998 = vunpack.c.l.s4 1966171168
        %v999 = vunpack.c.0.s8 %v998
        %v1000 = vlaneseq
        %v1001 = vshrl.u32 %v1000, 7
        %v1002 = vsub.s32 %v999, %v1001
        %v1003 = vrot.slane %v995, %v1002
        %v1004 = vcombine.high %v1003, %v1003
        %v1006 = vunpack.c.l.s4 1966171168
        %v1007 = vunpack.c.0.s8 %v1006
        %v1008 = vlaneseq
        %v1009 = vshrl.u32 %v1008, 7
        %v1010 = vsub.s32 %v1007, %v1009
        %v1011 = vrot.slane %v1003, %v1010
        %v1013 = vunpack.c.l.s4 1966171168
        %v1014 = vunpack.c.0.s8 %v1013
        %v1015 = vlaneseq
        %v1016 = vshrl.u32 %v1015, 7
        %v1017 = vsub.s32 %v1014, %v1016
        %v1018 = vrot.slane %v1004, %v1017
        %v1019 = vlaneseq
        %v1020 = vshrl.u32 %v1019, 7
        %v1021 = vsub.s32 0, %v1020
        %v1022 = vrot.slane %v1011, %v1021
        %v1023 = vlaneseq
        %v1024 = vshrl.u32 %v1023, 7
        %v1025 = vsub.s32 0, %v1024
        %v1026 = vrot.slane %v1018, %v1025
        %1029 = vrot.lane.b32.xlu0 %v809, 40
        %v1030 = vpop.permute.xlu0 %1029
        %1031 = vrot.lane.b32.xlu0 %v810, 40
        %v1032 = vpop.permute.xlu0 %1031
        %1033 = vrot.lane.b32.xlu0 %v811, 40
        %v1034 = vpop.permute.xlu0 %1033
        %1035 = vrot.lane.b32.xlu0 %v812, 40
        %v1036 = vpop.permute.xlu0 %1035
        %v1041 = vmul.f32 %v1022, %v1030
        %v1042 = vmul.f32 %v1022, %v1032
        %v1043 = vmul.f32 %v1026, %v1034
        %v1044 = vmul.f32 %v1026, %v1036
        %1049 = vrot.lane.b32.xlu0 %v1041, 88
        %v1050 = vpop.permute.xlu0 %1049
        %1051 = vrot.lane.b32.xlu0 %v1042, 88
        %v1052 = vpop.permute.xlu0 %1051
        %1053 = vrot.lane.b32.xlu0 %v1043, 88
        %v1054 = vpop.permute.xlu0 %1053
        %1055 = vrot.lane.b32.xlu0 %v1044, 88
        %v1056 = vpop.permute.xlu0 %1055
        %v1061 = vsel %vm508, %v1050, 0.0
        %1062 = vadd.xlane.f32.xlu0 %v1061
        %v1063 = vpop.xlane.xlu0 %1062
        %v1064 = vsel %vm508, %v1052, 0.0
        %1065 = vadd.xlane.f32.xlu0 %v1064
        %v1066 = vpop.xlane.xlu0 %1065
        %v1067 = vsel %vm508, %v1054, 0.0
        %1068 = vadd.xlane.f32.xlu0 %v1067
        %v1069 = vpop.xlane.xlu0 %1068
        %v1070 = vsel %vm508, %v1056, 0.0
        %1071 = vadd.xlane.f32.xlu0 %v1070
        %v1072 = vpop.xlane.xlu0 %1071
        %1073 = vset.pattern.permute.xlu0 49
        %1074 = vperm.xlu0 %1073, %v497
        %v1075 = vpop.permute.xlu0 %1074
        %v1081 = vlaneseq
        %v1082 = vshrl.u32 %v1081, 7
        %v1083 = vsub.s32 %v608, %v1082
        %v1084 = vrot.slane %v1063, %v1083
        %v1085 = vlaneseq
        %v1086 = vshrl.u32 %v1085, 7
        %v1087 = vsub.s32 %v613, %v1086
        %v1088 = vrot.slane %v1066, %v1087
        %v1089 = vsel %vm618, %v1088, %v1084
        %v1090 = vlaneseq
        %v1091 = vshrl.u32 %v1090, 7
        %v1092 = vsub.s32 %v608, %v1091
        %v1093 = vrot.slane %v1069, %v1092
        %v1094 = vlaneseq
        %v1095 = vshrl.u32 %v1094, 7
        %v1096 = vsub.s32 %v613, %v1095
        %v1097 = vrot.slane %v1072, %v1096
        %v1098 = vsel %vm618, %v1097, %v1093
        %v1099 = vsel %vm629, %v1098, %v1089
        %v1101 = vmul.f32 %v1075, %v1099
        %v1102 = vsel %vm633, %v1101, -inf
        %1103 = vmax.xlane.f32.xlu0 %v1102
        %v1104 = vpop.xlane.xlu0 %1103
        %v1105 = vsub.f32 %v1101, %v1104
        %v1106 = vmul.f32 %v1105, 1.442695
        %v1107 = vpow.pop %v1106
        %v1108 = vsel %vm633, %v1107, 0.0
        %1109 = vadd.xlane.f32.xlu0 %v1108
        %v1110 = vpop.xlane.xlu0 %1109
        %v1111 = vrcp.pop %v1110
        %v1112 = vmul.f32 %v1107, %v1111
        %v1113 = vlaneseq
        %v1114 = vshrl.u32 %v1113, 7
        %v1115 = vsub.s32 0, %v1114
        %v1116 = vrot.slane %v1112, %v1115
        %1118 = vbcast.lane.b32.xlu0 %v1116, 256
        %v1119 = vpop.permute.xlu0 %1118
        %s1121 = sor.u32 256, 8
        %1122 = vbcast.lane.b32.xlu0 %v1116, %s1121
        %v1123 = vpop.permute.xlu0 %1122
        %v1124 = vlaneseq
        %v1125 = vshrl.u32 %v1124, 7
        %v1126 = vsub.s32 1, %v1125
        %v1127 = vrot.slane %v1112, %v1126
        %1129 = vbcast.lane.b32.xlu0 %v1127, 256
        %v1130 = vpop.permute.xlu0 %1129
        %s1132 = sor.u32 256, 8
        %1133 = vbcast.lane.b32.xlu0 %v1127, %s1132
        %v1134 = vpop.permute.xlu0 %1133
        %v1135 = vmul.f32 %v1119, %v781
        %v1136 = vmul.f32 %v1123, %v782
        %v1137 = vmul.f32 %v1130, %v783
        %v1138 = vmul.f32 %v1134, %v784
        %v1139 = vsel %vm508, %v1135, 0.0
        %v1140 = vsel %vm508, %v1136, 0.0
        %v1141 = vadd.f32 %v1139, %v1140
        %v1142 = vrot.slane %v1141, 4
        %v1143 = vadd.f32 %v1141, %v1142
        %v1144 = vrot.slane %v1143, 2
        %v1145 = vadd.f32 %v1143, %v1144
        %v1146 = vrot.slane %v1145, 1
        %v1147 = vadd.f32 %v1145, %v1146
        %v1148 = vsel %vm508, %v1137, 0.0
        %v1149 = vsel %vm508, %v1138, 0.0
        %v1150 = vadd.f32 %v1148, %v1149
        %v1151 = vrot.slane %v1150, 4
        %v1152 = vadd.f32 %v1150, %v1151
        %v1153 = vrot.slane %v1152, 2
        %v1154 = vadd.f32 %v1152, %v1153
        %v1155 = vrot.slane %v1154, 1
        %v1156 = vadd.f32 %v1154, %v1155
        %v1159 = vsel %vm629, %v986, %v977
        %v1163 = vsel %vm629, %v1156, %v1147
        %1164 = vrot.lane.b32.xlu0 %v1163, 8
        %v1165 = vpop.permute.xlu0 %1164
        %v1167 = vsel %vm508, %v1159, %v1165
        %v1168 = vld [vmem:[#allocation2 + $0x50] sm:$0xff]
        %v1169 = vld [vmem:[#allocation2 + $0x58] sm:$0xff]
        %v1171 = vsel %vm283, %v1167, 0
        %1173 = vmatprep.subr.mxu0 0.0
        %1174 = vmatpush1.msra.mxu0 %v1168
        %1175 = vmatprep.subr.mxu0 0.0
        %1176 = vmatpush1.msra.mxu0 %v1169
        %1177 = vmatprep.subr.mxu0 0.0
        %1178 = vmatpush1.msra.mxu0 0.0
        %1179 = vmatprep.subr.mxu0 0.0
        %1180 = vmatpush1.msra.mxu0 0.0
        %1181 = vmatprep.subr.mxu0 0.0
        %1182 = vmatpush1.msra.mxu0 0.0
        %1183 = vmatprep.subr.mxu0 0.0
        %1184 = vmatpush1.msra.mxu0 0.0
        %1185 = vmatprep.subr.mxu0 0.0
        %1186 = vmatpush1.msra.mxu0 0.0
        %1187 = vmatprep.subr.mxu0 0.0
        %1188 = vmatpush1.msra.mxu0 0.0
        %1189 = vmatprep.subr.mxu0 0.0
        %1190 = vmatpush1.msra.mxu0 0.0
        %1191 = vmatprep.subr.mxu0 0.0
        %1192 = vmatpush1.msra.mxu0 0.0
        %1193 = vmatprep.subr.mxu0 0.0
        %1194 = vmatpush1.msra.mxu0 0.0
        %1195 = vmatprep.subr.mxu0 0.0
        %1196 = vmatpush1.msra.mxu0 0.0
        %1197 = vmatprep.subr.mxu0 0.0
        %1198 = vmatpush1.msra.mxu0 0.0
        %1199 = vmatprep.subr.mxu0 0.0
        %1200 = vmatpush1.msra.mxu0 0.0
        %1201 = vmatprep.subr.mxu0 0.0
        %1202 = vmatpush1.msra.mxu0 0.0
        %1203 = vmatprep.subr.mxu0 0.0
        %1204 = vmatpush1.msra.mxu0 0.0
        %1205 = vmatprep.subr.mxu0 0.0
        %1206 = vmatpush1.msra.mxu0 0.0
        %1207 = vmatprep.subr.mxu0 0.0
        %1208 = vmatpush1.msra.mxu0 0.0
        %1209 = vmatprep.subr.mxu0 0.0
        %1210 = vmatpush1.msra.mxu0 0.0
        %1211 = vmatprep.subr.mxu0 0.0
        %1212 = vmatpush1.msra.mxu0 0.0
        %1213 = vmatprep.subr.mxu0 0.0
        %1214 = vmatpush1.msra.mxu0 0.0
        %1215 = vmatprep.subr.mxu0 0.0
        %1216 = vmatpush1.msra.mxu0 0.0
        %1217 = vmatprep.subr.mxu0 0.0
        %1218 = vmatpush1.msra.mxu0 0.0
        %1219 = vmatprep.subr.mxu0 0.0
        %1220 = vmatpush1.msra.mxu0 0.0
        %1221 = vmatprep.subr.mxu0 0.0
        %1222 = vmatpush1.msra.mxu0 0.0
        %1223 = vmatprep.subr.mxu0 0.0
        %1224 = vmatpush1.msra.mxu0 0.0
        %1225 = vmatprep.subr.mxu0 0.0
        %1226 = vmatpush1.msra.mxu0 0.0
        %1227 = vmatprep.subr.mxu0 0.0
        %1228 = vmatpush1.msra.mxu0 0.0
        %1229 = vmatprep.subr.mxu0 0.0
        %1230 = vmatpush1.msra.mxu0 0.0
        %1231 = vmatprep.subr.mxu0 0.0
        %1232 = vmatpush1.msra.mxu0 0.0
        %1233 = vmatprep.subr.mxu0 0.0
        %1234 = vmatpush1.msra.mxu0 0.0
        %1235 = vmatprep.subr.mxu0 0.0
        %1236 = vmatpush1.msra.mxu0 0.0
        %1237 = vmatprep.mubr.f32.mxu0 0.0
        %1238 = vmatmul.mubr.f32.gmra.mrb[0].mxu0 %v1171
        %v1239 = vpop.f32.mrb[0].mxu0
        %v1240 = vadd.f32 0.0, %v1239
        %v1241 = vpop.f32.mrb[0].mxu0
        %1242 = vdwg.mxu0
        %v1243 = vadd.f32 %v476, %v1240
        %vm1244 = vcmask 254976
        %1245 = vst.msk [vmem:[%s248] sm:$0x3] %vm1244, %v1243
        %v1247 = vsel %vm406, %v405, %v387
        %vm1248 = vcmask 517120
        %1249 = vst.msk [vmem:[%s5] sm:$0x3] %vm1248, %v1247
        %1250 = vst.msk [vmem:[%s6] sm:$0xff] %vm508, %v781
        %1251 = vst.msk [vmem:[%s6 + $0x8] sm:$0xff] %vm508, %v782
        %1252 = vst.msk [vmem:[%s6 + $0x10] sm:$0xff] %vm508, %v783
        %1253 = vst.msk [vmem:[%s6 + $0x18] sm:$0xff] %vm508, %v784
        %s1254 = sand.u32 %s119, 1
        %s1255 = scalar_lea.sflag [#allocation4], %s1254
        %s1256 = sand.u32 %s119, 1
        %s1257 = smul.addr %s1256, 2
        %s1258 = scalar_lea.vmem [#allocation5], %s1257
        // Predicated region
        $region45: #{issharinginputtheproblem_forward.1} parent=35 // pred_check
          %p1259 = pneg %p129
        $region46: #{issharinginputtheproblem_forward.1} parent=35 // pred_check_branch
          %1261 = sbr.rel (%p1259) target = $region48
        $region47: #{issharinginputtheproblem_forward.1} parent=35 // pred_region
          %s1263 = ssub.s32 32, 32
          %1264 = vsyncadd %s1255, %s1263
          %s1265 = smul.addr %s22, 32
          %s1266 = scalar_lea.hbm %s4, %s1265
          %s1268 = sshll.u32 %s1258, 4
          %s1269 = int_to_ptr.vmem [resolvable:$true] %s1268
          %1271 = dma.vmem_to_hbm [thread:$0]  %s1269, 32, %s1266, %s1255
        $region48: #{issharinginputtheproblem_forward.1} parent=35 // pred_fallthru
          _
        // Predicated region
        $region49: #{issharinginputtheproblem_forward.1} parent=35 // pred_check
          %p1272 = pneg %p150
        $region50: #{issharinginputtheproblem_forward.1} parent=35 // pred_check_branch
          %1274 = sbr.rel (%p1272) target = $region52
        $region51: #{issharinginputtheproblem_forward.1} parent=35 // pred_region
          _
        $region52: #{issharinginputtheproblem_forward.1} parent=35 // pred_fallthru
          _
        // Predicated region
        $region53: #{issharinginputtheproblem_forward.1} parent=35 // pred_check
          %p1275 = pneg %p171
        $region54: #{issharinginputtheproblem_forward.1} parent=35 // pred_check_branch
          %1277 = sbr.rel (%p1275) target = $region56
        $region55: #{issharinginputtheproblem_forward.1} parent=35 // pred_region
          _
        $region56: #{issharinginputtheproblem_forward.1} parent=35 // pred_fallthru
          _
        // Predicated region
        $region57: #{issharinginputtheproblem_forward.1} parent=35 // pred_check
          %p1278 = pneg %p150
        $region58: #{issharinginputtheproblem_forward.1} parent=35 // pred_check_branch
          %1280 = sbr.rel (%p1278) target = $region60
        $region59: #{issharinginputtheproblem_forward.1} parent=35 // pred_region
          _
        $region60: #{issharinginputtheproblem_forward.1} parent=35 // pred_fallthru
          _
        // Predicated region
        $region61: #{issharinginputtheproblem_forward.1} parent=35 // pred_check
          %p1281 = pneg %p171
        $region62: #{issharinginputtheproblem_forward.1} parent=35 // pred_check_branch
          %1283 = sbr.rel (%p1281) target = $region64
        $region63: #{issharinginputtheproblem_forward.1} parent=35 // pred_region
          _
        $region64: #{issharinginputtheproblem_forward.1} parent=35 // pred_fallthru
          _
      $region36: #{issharinginputtheproblem_forward.1} parent=5 // pred_fallthru
        _
      %p1284 = scmp.le.s32.totalorder 2, %s17
      // Predicated region
      $region65: #{issharinginputtheproblem_forward.1} parent=5 // pred_check
        %p1285 = pneg %p1284
      $region66: #{issharinginputtheproblem_forward.1} parent=5 // pred_check_branch
        %1287 = sbr.rel (%p1285) target = $region68
      $region67: #{issharinginputtheproblem_forward.1} parent=5 // pred_region
        %s1288 = ssub.s32 %s17, 2
        // Predicated region
        $region69: #{issharinginputtheproblem_forward.1} parent=67 // pred_check
          %p1289 = pneg %p135
        $region70: #{issharinginputtheproblem_forward.1} parent=67 // pred_check_branch
          %1291 = sbr.rel (%p1289) target = $region72
        $region71: #{issharinginputtheproblem_forward.1} parent=67 // pred_region
          %s1292 = sand.u32 %s120, 1
          %s1293 = scalar_lea.sflag [#allocation4], %s1292
          %s1294 = sand.u32 %s120, 1
          %s1295 = smul.addr %s1294, 2
          %s1296 = scalar_lea.vmem [#allocation5], %s1295
          %1297 = dma.done %s1293, 32
        $region72: #{issharinginputtheproblem_forward.1} parent=67 // pred_fallthru
          _
      $region68: #{issharinginputtheproblem_forward.1} parent=5 // pred_fallthru
        _
    $region6: #{issharinginputtheproblem_forward.1} parent=1 // loop_footer
      %s21 = sadd.s32 1, %s17
    $region7: #{issharinginputtheproblem_forward.1} parent=1 // loop_footer_branch
      %16 = sbr.rel target = $region3
    $region8: #{issharinginputtheproblem_forward.1} parent=1 // loop_exit
      _
    %1298 = vsyncpa [#allocation3], 1
    %s1299 = scalar_lea.sflag [#allocation3], 1
    %1300 = vsyncpa %s1299, 1
    %1301 = vsyncpa [#allocation4], 1
    %s1302 = scalar_lea.sflag [#allocation4], 1
    %1303 = vsyncpa %s1302, 1

</llo_original>
